<compile_context>
chip_gen: v6e
topology: v6e:2x2x1
jax: 0.10.0
libtpu: 0.0.40
codegen_flags: <defaults>
</compile_context>

<pallas_src>
import functools
import math

import numpy as np
import jax
import jax.numpy as jnp
from jax.experimental import pallas as pl
from jax.experimental.pallas import tpu as pltpu  # noqa: F401  (TPU backend)


def _pe_kernel(a_y_ref, a_x_ref, phase_ref, row_ref, col_ref, o_ref):
    """a_y/a_x/phase: (C,1) per-channel constants; row/col: (1,HW); o: (C,HW)."""
    angle = (row_ref[...] * a_y_ref[...]
             + col_ref[...] * a_x_ref[...]
             + phase_ref[...])                     # (C, HW) via broadcast
    o_ref[...] = jnp.sin(angle).astype(o_ref.dtype)


@functools.lru_cache(maxsize=None)
def _pe_table(num_pos_feats, temperature, normalize, scale, maxH, maxW):
    """Compute the (C, maxH, maxW) positional-encoding buffer once per config."""
    C = 2 * num_pos_feats
    HW = maxH * maxW

    # ---- per-channel constants (numpy, trace time) --------------------------
    k = np.arange(num_pos_feats, dtype=np.float64)
    # dim_t[k] = T ** (2*floor(k/2)/npf)  ->  keep its reciprocal.
    inv_dim_t = np.asarray(temperature, np.float64) ** (
        -(2.0 * np.floor(k / 2.0)) / float(num_pos_feats))
    y_norm = scale / (float(maxH) + 1e-06) if normalize else 1.0
    x_norm = scale / (float(maxW) + 1e-06) if normalize else 1.0
    # First half of channels = pos_y, second half = pos_x.
    a_y = np.concatenate([inv_dim_t * y_norm, np.zeros(num_pos_feats)])
    a_x = np.concatenate([np.zeros(num_pos_feats), inv_dim_t * x_norm])
    # even channel -> sin, odd channel -> cos == sin(x + pi/2)
    phase_half = (np.arange(num_pos_feats) % 2).astype(np.float64) * (0.5 * np.pi)
    phase = np.concatenate([phase_half, phase_half])

    a_y = a_y.reshape(C, 1).astype(np.float32)
    a_x = a_x.reshape(C, 1).astype(np.float32)
    phase = phase.reshape(C, 1).astype(np.float32)

    # ---- spatial constants: cumsum-of-ones == row+1 / col+1 -----------------
    p = np.arange(HW, dtype=np.int64)
    row1 = ((p // maxW) + 1).astype(np.float32).reshape(1, HW)
    col1 = ((p % maxW) + 1).astype(np.float32).reshape(1, HW)

    pe_flat = pl.pallas_call(
        _pe_kernel,
        out_shape=jax.ShapeDtypeStruct((C, HW), jnp.float32),
        grid=(1,),
        in_specs=[
            pl.BlockSpec((C, 1), lambda i: (0, 0)),
            pl.BlockSpec((C, 1), lambda i: (0, 0)),
            pl.BlockSpec((C, 1), lambda i: (0, 0)),
            pl.BlockSpec((1, HW), lambda i: (0, 0)),
            pl.BlockSpec((1, HW), lambda i: (0, 0)),
        ],
        out_specs=pl.BlockSpec((C, HW), lambda i: (0, 0)),
        cost_estimate=pl.CostEstimate(
            flops=5 * C * HW,
            transcendentals=C * HW,
            bytes_accessed=4 * (C * HW + 2 * HW + 3 * C)),
    )(a_y, a_x, phase, row1, col1)

    # Free reshape (row-major), no transpose: (C, HW) -> (C, maxH, maxW).
    return pe_flat.reshape(C, maxH, maxW)


def position_embedding_sine(x, *, num_pos_feats=64, temperature=10000,
                            normalize=False, scale=None, maxH=30, maxW=30):
    """Forward pass: ignores x's values, only uses its batch size (like the module)."""
    if scale is not None and normalize is False:
        raise ValueError('normalize should be True if scale is passed')
    if scale is None:
        scale = 2 * math.pi

    B = x.shape[0]
    C = 2 * num_pos_feats
    pe = _pe_table(int(num_pos_feats), float(temperature), bool(normalize),
                   float(scale), int(maxH), int(maxW))
    # Mirrors `pe.repeat((B,1,1,1))`; kept as a broadcast so a jitted consumer
    # can fuse it instead of materializing B copies in HBM.
    return jnp.broadcast_to(pe[None], (B, C, maxH, maxW))


def _reference(B, num_pos_feats, temperature, normalize, scale, maxH, maxW):
    """Pure-JAX reference mirroring the PyTorch buffer generation."""
    ones = jnp.ones((1, maxH, maxW), jnp.float32)
    y_embed = jnp.cumsum(ones, axis=1)
    x_embed = jnp.cumsum(ones, axis=2)
    if normalize:
        eps = 1e-06
        y_embed = y_embed / (y_embed[:, -1:, :] + eps) * scale
        x_embed = x_embed / (x_embed[:, :, -1:] + eps) * scale
    dim_t = jnp.arange(num_pos_feats, dtype=jnp.float32)
    dim_t = temperature ** (2 * jnp.floor(dim_t / 2) / num_pos_feats)
    pos_x = x_embed[:, :, :, None] / dim_t
    pos_y = y_embed[:, :, :, None] / dim_t
    pos_x = jnp.stack((jnp.sin(pos_x[:, :, :, 0::2]),
                       jnp.cos(pos_x[:, :, :, 1::2])), axis=4).reshape(1, maxH, maxW, -1)
    pos_y = jnp.stack((jnp.sin(pos_y[:, :, :, 0::2]),
                       jnp.cos(pos_y[:, :, :, 1::2])), axis=4).reshape(1, maxH, maxW, -1)
    pos = jnp.concatenate((pos_y, pos_x), axis=3).transpose(0, 3, 1, 2)
    return jnp.tile(pos, (B, 1, 1, 1))


if __name__ == "__main__":
    # Small config consistent with the module: num_pos_feats=32 -> 64 channels,
    # maxH=maxW=16. Input x only supplies the batch dimension.
    key = jax.random.PRNGKey(0)
    B, C_in, H, W = 2, 4, 16, 16
    x = jax.random.normal(key, (B, C_in, H, W), dtype=jnp.float32)

    num_pos_feats, temperature = 32, 10000
    maxH = maxW = 16

    # normalize = False
    out = position_embedding_sine(
        x, num_pos_feats=num_pos_feats, temperature=temperature,
        normalize=False, scale=None, maxH=maxH, maxW=maxW)
    out = jax.block_until_ready(out)
    ref = _reference(B, num_pos_feats, float(temperature), False,
                     2 * math.pi, maxH, maxW)
    assert out.shape == (B, 2 * num_pos_feats, maxH, maxW), out.shape
    assert jnp.allclose(out, ref, atol=2e-5, rtol=2e-5), \
        "mismatch vs reference (normalize=False)"

    # normalize = True
    out_n = position_embedding_sine(
        x, num_pos_feats=num_pos_feats, temperature=temperature,
        normalize=True, scale=None, maxH=maxH, maxW=maxW)
    out_n = jax.block_until_ready(out_n)
    ref_n = _reference(B, num_pos_feats, float(temperature), True,
                       2 * math.pi, maxH, maxW)
    assert jnp.allclose(out_n, ref_n, atol=2e-5, rtol=2e-5), \
        "mismatch vs reference (normalize=True)"

    print("KERNEL_OK")
</pallas_src>

<mosaic_0001>
module attributes {stable_mosaic.version = 11 : i64} {
  func.func @_pe_kernel(%arg0: i32, %arg1: memref<64x1xf32, #tpu.memory_space<vmem>>, %arg2: memref<64x1xf32, #tpu.memory_space<vmem>>, %arg3: memref<64x1xf32, #tpu.memory_space<vmem>>, %arg4: memref<1x256xf32, #tpu.memory_space<vmem>>, %arg5: memref<1x256xf32, #tpu.memory_space<vmem>>, %arg6: memref<64x256xf32, #tpu.memory_space<vmem>>) attributes {dimension_semantics = [#tpu.dimension_semantics<arbitrary>], iteration_bounds = array<i64: 1>, scalar_prefetch = 0 : i64, scratch_operands = 0 : i64, tpu.core_type = #tpu.core_type<tc>, window_params = [{pipeline_mode = #tpu.pipeline_mode<synchronous>, transform_indices = @transform_0, window_bounds = array<i64: 64, 1>}, {pipeline_mode = #tpu.pipeline_mode<synchronous>, transform_indices = @transform_1, window_bounds = array<i64: 64, 1>}, {pipeline_mode = #tpu.pipeline_mode<synchronous>, transform_indices = @transform_2, window_bounds = array<i64: 64, 1>}, {pipeline_mode = #tpu.pipeline_mode<synchronous>, transform_indices = @transform_3, window_bounds = array<i64: 1, 256>}, {pipeline_mode = #tpu.pipeline_mode<synchronous>, transform_indices = @transform_4, window_bounds = array<i64: 1, 256>}, {pipeline_mode = #tpu.pipeline_mode<synchronous>, transform_indices = @transform_5, window_bounds = array<i64: 64, 256>}]} {
    %c0 = arith.constant 0 : index
    %c0_0 = arith.constant 0 : index
    %0 = vector.load %arg4[%c0, %c0_0] : memref<1x256xf32, #tpu.memory_space<vmem>>, vector<1x256xf32>
    %c0_1 = arith.constant 0 : index
    %c0_2 = arith.constant 0 : index
    %1 = vector.load %arg1[%c0_1, %c0_2] : memref<64x1xf32, #tpu.memory_space<vmem>>, vector<64x1xf32>
    %2 = vector.broadcast %0 : vector<1x256xf32> to vector<64x256xf32>
    %3 = vector.broadcast %1 : vector<64x1xf32> to vector<64x256xf32>
    %4 = arith.mulf %2, %3 : vector<64x256xf32>
    %c0_3 = arith.constant 0 : index
    %c0_4 = arith.constant 0 : index
    %5 = vector.load %arg5[%c0_3, %c0_4] : memref<1x256xf32, #tpu.memory_space<vmem>>, vector<1x256xf32>
    %c0_5 = arith.constant 0 : index
    %c0_6 = arith.constant 0 : index
    %6 = vector.load %arg2[%c0_5, %c0_6] : memref<64x1xf32, #tpu.memory_space<vmem>>, vector<64x1xf32>
    %7 = vector.broadcast %5 : vector<1x256xf32> to vector<64x256xf32>
    %8 = vector.broadcast %6 : vector<64x1xf32> to vector<64x256xf32>
    %9 = arith.mulf %7, %8 : vector<64x256xf32>
    %10 = arith.addf %4, %9 : vector<64x256xf32>
    %c0_7 = arith.constant 0 : index
    %c0_8 = arith.constant 0 : index
    %11 = vector.load %arg3[%c0_7, %c0_8] : memref<64x1xf32, #tpu.memory_space<vmem>>, vector<64x1xf32>
    %12 = vector.broadcast %11 : vector<64x1xf32> to vector<64x256xf32>
    %13 = arith.addf %10, %12 : vector<64x256xf32>
    %14 = math.sin %13 : vector<64x256xf32>
    %c0_9 = arith.constant 0 : index
    %c0_10 = arith.constant 0 : index
    %15 = vector.load %arg6[%c0_9, %c0_10] : memref<64x256xf32, #tpu.memory_space<vmem>>, vector<64x256xf32>
    tpu.vector_store %arg6[%c0_9, %c0_10], %14 {strides = array<i32>} : memref<64x256xf32, #tpu.memory_space<vmem>>, vector<64x256xf32>,
    return
  }
  func.func @transform_0(%arg0: i32) -> (i32, i32) {
    %c0_i32 = arith.constant 0 : i32
    %c0_i32_0 = arith.constant 0 : i32
    %c0_i32_1 = arith.constant 0 : i32
    return %c0_i32, %c0_i32_0 : i32, i32
  }
  func.func @transform_1(%arg0: i32) -> (i32, i32) {
    %c0_i32 = arith.constant 0 : i32
    %c0_i32_0 = arith.constant 0 : i32
    %c0_i32_1 = arith.constant 0 : i32
    return %c0_i32, %c0_i32_0 : i32, i32
  }
  func.func @transform_2(%arg0: i32) -> (i32, i32) {
    %c0_i32 = arith.constant 0 : i32
    %c0_i32_0 = arith.constant 0 : i32
    %c0_i32_1 = arith.constant 0 : i32
    return %c0_i32, %c0_i32_0 : i32, i32
  }
  func.func @transform_3(%arg0: i32) -> (i32, i32) {
    %c0_i32 = arith.constant 0 : i32
    %c0_i32_0 = arith.constant 0 : i32
    %c0_i32_1 = arith.constant 0 : i32
    return %c0_i32, %c0_i32_0 : i32, i32
  }
  func.func @transform_4(%arg0: i32) -> (i32, i32) {
    %c0_i32 = arith.constant 0 : i32
    %c0_i32_0 = arith.constant 0 : i32
    %c0_i32_1 = arith.constant 0 : i32
    return %c0_i32, %c0_i32_0 : i32, i32
  }
  func.func @transform_5(%arg0: i32) -> (i32, i32) {
    %c0_i32 = arith.constant 0 : i32
    %c0_i32_0 = arith.constant 0 : i32
    %c0_i32_1 = arith.constant 0 : i32
    return %c0_i32, %c0_i32_0 : i32, i32
  }
}

</mosaic_0001>

<llo_original>
// kernel: tpu_custom_call.1
$region0: #{tpu_custom_call.1}
  #allocation0 [shape = 'u32[]', space=smem, size = 0x4, offset = 0x4, fixed_abs, tag = 'smem constant byte address 0x4 - core index']
  #allocation1 [shape = 'u32[144,128]{1,0:T(1,128)}', space=vmem, size = 0x12000, scoped, tag = 'internal scratch']
  %s0 = inlined_call_operand.vmem [shape: f32[64,1], index: 0, kind: input, shape index: {}]
  %s1 = inlined_call_operand.vmem [shape: f32[64,1], index: 1, kind: input, shape index: {}]
  %s2 = inlined_call_operand.vmem [shape: f32[64,1], index: 2, kind: input, shape index: {}]
  %s3 = inlined_call_operand.vmem [shape: f32[1,256], index: 3, kind: input, shape index: {}]
  %s4 = inlined_call_operand.vmem [shape: f32[1,256], index: 4, kind: input, shape index: {}]
  %s5 = inlined_call_operand.hbm [shape: f32[64,256], index: 5, kind: output, shape index: {}]
  %s6 = sld [smem:[#allocation0]]
  $region30: #{tpu_custom_call.1} parent=0
    _
  %s8 = ssub.s32 1, %s6
  %s9 = scalar_select 0, %s8, %s6
  $region1: #{tpu_custom_call.1} parent=0
    #allocation2 [shape = 'u8[65536]{0}', space=vmem, size = 0x10000, scoped, tag = 'output window, operand 0, single buffered']
    #allocation3 [shape = 's32[1]{0}', space=sflag, size = 0x4, scoped, tag = 'scoped memory for tpu_custom_call.1']
    %10 = vsyncpa [#allocation3], 0
    // Predicated region
    $region2: #{tpu_custom_call.1} parent=1 // pred_check
      _
    $region3: #{tpu_custom_call.1} parent=1 // pred_check_branch
      %12 = sbr.rel (0) target = $region5
    $region4: #{tpu_custom_call.1} parent=1 // pred_region
      _
    $region5: #{tpu_custom_call.1} parent=1 // pred_fallthru
      _
    // Predicated region
    $region6: #{tpu_custom_call.1} parent=1 // pred_check
      _
    $region7: #{tpu_custom_call.1} parent=1 // pred_check_branch
      %14 = sbr.rel (0) target = $region9
    $region8: #{tpu_custom_call.1} parent=1 // pred_region
      _
    $region9: #{tpu_custom_call.1} parent=1 // pred_fallthru
      _
    // Predicated region
    $region10: #{tpu_custom_call.1} parent=1 // pred_check
      _
    $region11: #{tpu_custom_call.1} parent=1 // pred_check_branch
      %16 = sbr.rel (0) target = $region13
    $region12: #{tpu_custom_call.1} parent=1 // pred_region
      _
    $region13: #{tpu_custom_call.1} parent=1 // pred_fallthru
      _
    // Predicated region
    $region14: #{tpu_custom_call.1} parent=1 // pred_check
      _
    $region15: #{tpu_custom_call.1} parent=1 // pred_check_branch
      %18 = sbr.rel (0) target = $region17
    $region16: #{tpu_custom_call.1} parent=1 // pred_region
      _
    $region17: #{tpu_custom_call.1} parent=1 // pred_fallthru
      _
    // Predicated region
    $region18: #{tpu_custom_call.1} parent=1 // pred_check
      _
    $region19: #{tpu_custom_call.1} parent=1 // pred_check_branch
      %20 = sbr.rel (0) target = $region21
    $region20: #{tpu_custom_call.1} parent=1 // pred_region
      _
    $region21: #{tpu_custom_call.1} parent=1 // pred_fallthru
      _
    %v21 = vld [vmem:[%s3] sm:$0x3]
    %v22 = vld [vmem:[%s0] sm:$0xff]
    %v23 = vld [vmem:[%s0 + $0x8] sm:$0xff]
    %v24 = vld [vmem:[%s0 + $0x10] sm:$0xff]
    %v25 = vld [vmem:[%s0 + $0x18] sm:$0xff]
    %v26 = vld [vmem:[%s0 + $0x20] sm:$0xff]
    %v27 = vld [vmem:[%s0 + $0x28] sm:$0xff]
    %v28 = vld [vmem:[%s0 + $0x30] sm:$0xff]
    %v29 = vld [vmem:[%s0 + $0x38] sm:$0xff]
    %v31 = vlaneseq
    %v32 = vshrl.u32 %v31, 7
    %v33 = vsub.s32 0, %v32
    %v34 = vrot.slane %v21, %v33
    %v35 = vlaneseq
    %v36 = vshrl.u32 %v35, 7
    %v37 = vsub.s32 1, %v36
    %v38 = vrot.slane %v21, %v37
    %42 = vset.pattern.permute.xlu0 0
    %43 = vperm.xlu0 %42, %v22
    %v44 = vpop.permute.xlu0 %43
    %47 = vset.pattern.permute.xlu0 0
    %48 = vperm.xlu0 %47, %v23
    %v49 = vpop.permute.xlu0 %48
    %52 = vset.pattern.permute.xlu0 0
    %53 = vperm.xlu0 %52, %v24
    %v54 = vpop.permute.xlu0 %53
    %57 = vset.pattern.permute.xlu0 0
    %58 = vperm.xlu0 %57, %v25
    %v59 = vpop.permute.xlu0 %58
    %62 = vset.pattern.permute.xlu0 0
    %63 = vperm.xlu0 %62, %v26
    %v64 = vpop.permute.xlu0 %63
    %67 = vset.pattern.permute.xlu0 0
    %68 = vperm.xlu0 %67, %v27
    %v69 = vpop.permute.xlu0 %68
    %72 = vset.pattern.permute.xlu0 0
    %73 = vperm.xlu0 %72, %v28
    %v74 = vpop.permute.xlu0 %73
    %77 = vset.pattern.permute.xlu0 0
    %78 = vperm.xlu0 %77, %v29
    %v79 = vpop.permute.xlu0 %78
    %v81 = vmul.f32 %v34, %v44
    %v82 = vmul.f32 %v38, %v44
    %v83 = vmul.f32 %v34, %v49
    %v84 = vmul.f32 %v38, %v49
    %v85 = vmul.f32 %v34, %v54
    %v86 = vmul.f32 %v38, %v54
    %v87 = vmul.f32 %v34, %v59
    %v88 = vmul.f32 %v38, %v59
    %v89 = vmul.f32 %v34, %v64
    %v90 = vmul.f32 %v38, %v64
    %v91 = vmul.f32 %v34, %v69
    %v92 = vmul.f32 %v38, %v69
    %v93 = vmul.f32 %v34, %v74
    %v94 = vmul.f32 %v38, %v74
    %v95 = vmul.f32 %v34, %v79
    %v96 = vmul.f32 %v38, %v79
    %v97 = vld [vmem:[%s4] sm:$0x3]
    %v98 = vld [vmem:[%s1] sm:$0xff]
    %v99 = vld [vmem:[%s1 + $0x8] sm:$0xff]
    %v100 = vld [vmem:[%s1 + $0x10] sm:$0xff]
    %v101 = vld [vmem:[%s1 + $0x18] sm:$0xff]
    %v102 = vld [vmem:[%s1 + $0x20] sm:$0xff]
    %v103 = vld [vmem:[%s1 + $0x28] sm:$0xff]
    %v104 = vld [vmem:[%s1 + $0x30] sm:$0xff]
    %v105 = vld [vmem:[%s1 + $0x38] sm:$0xff]
    %v107 = vlaneseq
    %v108 = vshrl.u32 %v107, 7
    %v109 = vsub.s32 0, %v108
    %v110 = vrot.slane %v97, %v109
    %v111 = vlaneseq
    %v112 = vshrl.u32 %v111, 7
    %v113 = vsub.s32 1, %v112
    %v114 = vrot.slane %v97, %v113
    %118 = vset.pattern.permute.xlu0 0
    %119 = vperm.xlu0 %118, %v98
    %v120 = vpop.permute.xlu0 %119
    %123 = vset.pattern.permute.xlu0 0
    %124 = vperm.xlu0 %123, %v99
    %v125 = vpop.permute.xlu0 %124
    %128 = vset.pattern.permute.xlu0 0
    %129 = vperm.xlu0 %128, %v100
    %v130 = vpop.permute.xlu0 %129
    %133 = vset.pattern.permute.xlu0 0
    %134 = vperm.xlu0 %133, %v101
    %v135 = vpop.permute.xlu0 %134
    %138 = vset.pattern.permute.xlu0 0
    %139 = vperm.xlu0 %138, %v102
    %v140 = vpop.permute.xlu0 %139
    %143 = vset.pattern.permute.xlu0 0
    %144 = vperm.xlu0 %143, %v103
    %v145 = vpop.permute.xlu0 %144
    %148 = vset.pattern.permute.xlu0 0
    %149 = vperm.xlu0 %148, %v104
    %v150 = vpop.permute.xlu0 %149
    %153 = vset.pattern.permute.xlu0 0
    %154 = vperm.xlu0 %153, %v105
    %v155 = vpop.permute.xlu0 %154
    %v157 = vmul.f32 %v110, %v120
    %v158 = vmul.f32 %v114, %v120
    %v159 = vmul.f32 %v110, %v125
    %v160 = vmul.f32 %v114, %v125
    %v161 = vmul.f32 %v110, %v130
    %v162 = vmul.f32 %v114, %v130
    %v163 = vmul.f32 %v110, %v135
    %v164 = vmul.f32 %v114, %v135
    %v165 = vmul.f32 %v110, %v140
    %v166 = vmul.f32 %v114, %v140
    %v167 = vmul.f32 %v110, %v145
    %v168 = vmul.f32 %v114, %v145
    %v169 = vmul.f32 %v110, %v150
    %v170 = vmul.f32 %v114, %v150
    %v171 = vmul.f32 %v110, %v155
    %v172 = vmul.f32 %v114, %v155
    %v173 = vadd.f32 %v81, %v157
    %v174 = vadd.f32 %v82, %v158
    %v175 = vadd.f32 %v83, %v159
    %v176 = vadd.f32 %v84, %v160
    %v177 = vadd.f32 %v85, %v161
    %v178 = vadd.f32 %v86, %v162
    %v179 = vadd.f32 %v87, %v163
    %v180 = vadd.f32 %v88, %v164
    %v181 = vadd.f32 %v89, %v165
    %v182 = vadd.f32 %v90, %v166
    %v183 = vadd.f32 %v91, %v167
    %v184 = vadd.f32 %v92, %v168
    %v185 = vadd.f32 %v93, %v169
    %v186 = vadd.f32 %v94, %v170
    %v187 = vadd.f32 %v95, %v171
    %v188 = vadd.f32 %v96, %v172
    %v189 = vld [vmem:[%s2] sm:$0xff]
    %v190 = vld [vmem:[%s2 + $0x8] sm:$0xff]
    %v191 = vld [vmem:[%s2 + $0x10] sm:$0xff]
    %v192 = vld [vmem:[%s2 + $0x18] sm:$0xff]
    %v193 = vld [vmem:[%s2 + $0x20] sm:$0xff]
    %v194 = vld [vmem:[%s2 + $0x28] sm:$0xff]
    %v195 = vld [vmem:[%s2 + $0x30] sm:$0xff]
    %v196 = vld [vmem:[%s2 + $0x38] sm:$0xff]
    %198 = vset.pattern.permute.xlu0 0
    %199 = vperm.xlu0 %198, %v189
    %v200 = vpop.permute.xlu0 %199
    %203 = vset.pattern.permute.xlu0 0
    %204 = vperm.xlu0 %203, %v190
    %v205 = vpop.permute.xlu0 %204
    %208 = vset.pattern.permute.xlu0 0
    %209 = vperm.xlu0 %208, %v191
    %v210 = vpop.permute.xlu0 %209
    %213 = vset.pattern.permute.xlu0 0
    %214 = vperm.xlu0 %213, %v192
    %v215 = vpop.permute.xlu0 %214
    %218 = vset.pattern.permute.xlu0 0
    %219 = vperm.xlu0 %218, %v193
    %v220 = vpop.permute.xlu0 %219
    %223 = vset.pattern.permute.xlu0 0
    %224 = vperm.xlu0 %223, %v194
    %v225 = vpop.permute.xlu0 %224
    %228 = vset.pattern.permute.xlu0 0
    %229 = vperm.xlu0 %228, %v195
    %v230 = vpop.permute.xlu0 %229
    %233 = vset.pattern.permute.xlu0 0
    %234 = vperm.xlu0 %233, %v196
    %v235 = vpop.permute.xlu0 %234
    %v237 = vadd.f32 %v173, %v200
    %v238 = vadd.f32 %v174, %v200
    %v239 = vadd.f32 %v175, %v205
    %v240 = vadd.f32 %v176, %v205
    %v241 = vadd.f32 %v177, %v210
    %v242 = vadd.f32 %v178, %v210
    %v243 = vadd.f32 %v179, %v215
    %v244 = vadd.f32 %v180, %v215
    %v245 = vadd.f32 %v181, %v220
    %v246 = vadd.f32 %v182, %v220
    %v247 = vadd.f32 %v183, %v225
    %v248 = vadd.f32 %v184, %v225
    %v249 = vadd.f32 %v185, %v230
    %v250 = vadd.f32 %v186, %v230
    %v251 = vadd.f32 %v187, %v235
    %v252 = vadd.f32 %v188, %v235
    %v253 = vand.u32 2147483647, %v237
    %vm254 = vcmp.le.f32.partialorder %v253, 0.7853982
    %vm255 = vcmp.lt.s32.totalorder %v237, 0
    %v256 = vand.u32 %v237, 2139095040
    %v257 = vshrl.u32 %v256, 23
    %v258 = vsub.s32 %v257, 127
    %v259 = vand.u32 2147483647, %v237
    %v260 = vand.u32 %v259, 8388607
    %v261 = vor.u32 %v260, 8388608
    %v262 = vsub.s32 0, %v261
    %v263 = vadd.s32 %v258, 1
    %vm264 = vcmp.gt.s32.totalorder %v263, 0
    %v265 = vsel %vm264, %v263, 0
    %v266 = vshrl.u32 %v265, 5
    %v267 = vand.u32 %v265, 31
    %v268 = vsub.s32 32, %v267
    %v269 = vshrl.u32 683565275, %v268
    %v270 = vshll.u32 683565275, %v267
    %v271 = vshrl.u32 2475754826, %v268
    %v272 = vor.u32 %v270, %v271
    %v273 = vshll.u32 2475754826, %v267
    %v274 = vshrl.u32 2131351028, %v268
    %v275 = vor.u32 %v273, %v274
    %v276 = vshll.u32 2131351028, %v267
    %v277 = vshrl.u32 2102212464, %v268
    %v278 = vor.u32 %v276, %v277
    %v279 = vshll.u32 2102212464, %v267
    %v280 = vshrl.u32 920167782, %v268
    %v281 = vor.u32 %v279, %v280
    %v282 = vshll.u32 920167782, %v267
    %v283 = vshrl.u32 1326507024, %v268
    %v284 = vor.u32 %v282, %v283
    %vm285 = vcmp.lt.s32.totalorder %v266, 1
    %vm286 = vcmp.lt.s32.totalorder %v266, 2
    %vm287 = vcmp.lt.s32.totalorder %v266, 3
    %vm288 = vcmp.lt.s32.totalorder %v266, 4
    %v289 = vsel %vm285, %v269, %v272
    %v290 = vsel %vm288, %v278, 2102212464
    %v291 = vsel %vm287, %v275, %v290
    %v292 = vsel %vm286, %v289, %v291
    %v293 = vsel %vm285, %v272, %v275
    %v294 = vsel %vm288, %v281, 920167782
    %v295 = vsel %vm287, %v278, %v294
    %v296 = vsel %vm286, %v293, %v295
    %v297 = vsel %vm285, %v275, %v278
    %v298 = vsel %vm288, %v284, 1326507024
    %v299 = vsel %vm287, %v281, %v298
    %v300 = vsel %vm286, %v297, %v299
    %v301 = vshll.u32 %v261, 8
    %v302 = vmul.u32.u64.compose %v301, %v300
    %v303 = vextract.low.u32 %v302
    %v304 = vextract.high.u32 %v302
    %v305 = vmul.u32.u64.compose %v301, %v296
    %v306 = vextract.low.u32 %v305
    %v307 = vextract.high.u32 %v305
    %v308 = vmul.u32 %v301, %v292
    %v309 = vadd.s32 %v304, %v306
    %vm310 = vc.u32 %v304, %v306
    %v311 = vadd.s32 %v307, 1
    %v312 = vsel %vm310, %v311, %v307
    %v313 = vadd.s32 %v308, %v312
    %v314 = vadd.s32 %v313, 536870912
    %v315 = vshrl.u32 %v314, 30
    %v316 = vshll.u32 %v315, 30
    %v317 = vsub.s32 %v313, %v316
    %vm318 = vcmp.lt.s32.totalorder %v317, 0
    %v319 = vsub.s32 0, %v317
    %v320 = vsel %vm318, %v319, %v317
    %v321 = vclz %v320
    %v322 = vsub.s32 %v321, 2
    %vm323 = vcmp.gt.s32.totalorder 0, %v322
    %v324 = vsel %vm323, 0, %v322
    %v325 = vsub.s32 32, %v324
    %v326 = vshll.u32 %v317, %v324
    %v327 = vshrl.u32 %v309, %v325
    %v328 = vor.u32 %v326, %v327
    %v329 = vsub.s32 4294967266, %v324
    %v330 = vadd.s32 %v329, 127
    %v331 = vshll.u32 %v330, 23
    %v332 = vor.u32 4788187, %v331
    %v333 = vand.u32 2147483647, %v332
    %v335 = vcvt.s32.f32 %v328
    %v336 = vmul.f32 %v335, %v333
    %v337 = vxor.u32 %v336, 2147483648
    %v338 = vsel %vm255, %v337, %v336
    %v339 = vsub.s32 4, %v315
    %v340 = vsel %vm255, %v339, %v315
    %v341 = vsel %vm254, %v237, %v338
    %v342 = vsel %vm254, 0, %v340
    %v343 = vcosq.f32.pop %v341
    %v344 = vsinq.f32.pop %v341
    %vm345 = vweird.f32 %v237
    %v346 = vadd.s32 %v342, 3
    %v347 = vand.u32 %v346, 3
    %vm348 = vcmp.lt.s32.totalorder %v347, 2
    %vm349 = vcmp.eq.s32.totalorder %v347, 0
    %v350 = vxor.u32 %v344, 2147483648
    %v351 = vsel %vm349, %v343, %v350
    %vm352 = vcmp.eq.s32.totalorder %v347, 2
    %v353 = vxor.u32 %v343, 2147483648
    %v354 = vsel %vm352, %v353, %v344
    %v355 = vsel %vm348, %v351, %v354
    %v356 = vsel %vm345, nan, %v355
    %v357 = vand.u32 2147483647, %v238
    %vm358 = vcmp.le.f32.partialorder %v357, 0.7853982
    %vm359 = vcmp.lt.s32.totalorder %v238, 0
    %v360 = vand.u32 %v238, 2139095040
    %v361 = vshrl.u32 %v360, 23
    %v362 = vsub.s32 %v361, 127
    %v363 = vand.u32 2147483647, %v238
    %v364 = vand.u32 %v363, 8388607
    %v365 = vor.u32 %v364, 8388608
    %v366 = vsub.s32 0, %v365
    %v367 = vadd.s32 %v362, 1
    %vm368 = vcmp.gt.s32.totalorder %v367, 0
    %v369 = vsel %vm368, %v367, 0
    %v370 = vshrl.u32 %v369, 5
    %v371 = vand.u32 %v369, 31
    %v372 = vsub.s32 32, %v371
    %v373 = vshrl.u32 683565275, %v372
    %v374 = vshll.u32 683565275, %v371
    %v375 = vshrl.u32 2475754826, %v372
    %v376 = vor.u32 %v374, %v375
    %v377 = vshll.u32 2475754826, %v371
    %v378 = vshrl.u32 2131351028, %v372
    %v379 = vor.u32 %v377, %v378
    %v380 = vshll.u32 2131351028, %v371
    %v381 = vshrl.u32 2102212464, %v372
    %v382 = vor.u32 %v380, %v381
    %v383 = vshll.u32 2102212464, %v371
    %v384 = vshrl.u32 920167782, %v372
    %v385 = vor.u32 %v383, %v384
    %v386 = vshll.u32 920167782, %v371
    %v387 = vshrl.u32 1326507024, %v372
    %v388 = vor.u32 %v386, %v387
    %vm389 = vcmp.lt.s32.totalorder %v370, 1
    %vm390 = vcmp.lt.s32.totalorder %v370, 2
    %vm391 = vcmp.lt.s32.totalorder %v370, 3
    %vm392 = vcmp.lt.s32.totalorder %v370, 4
    %v393 = vsel %vm389, %v373, %v376
    %v394 = vsel %vm392, %v382, 2102212464
    %v395 = vsel %vm391, %v379, %v394
    %v396 = vsel %vm390, %v393, %v395
    %v397 = vsel %vm389, %v376, %v379
    %v398 = vsel %vm392, %v385, 920167782
    %v399 = vsel %vm391, %v382, %v398
    %v400 = vsel %vm390, %v397, %v399
    %v401 = vsel %vm389, %v379, %v382
    %v402 = vsel %vm392, %v388, 1326507024
    %v403 = vsel %vm391, %v385, %v402
    %v404 = vsel %vm390, %v401, %v403
    %v405 = vshll.u32 %v365, 8
    %v406 = vmul.u32.u64.compose %v405, %v404
    %v407 = vextract.low.u32 %v406
    %v408 = vextract.high.u32 %v406
    %v409 = vmul.u32.u64.compose %v405, %v400
    %v410 = vextract.low.u32 %v409
    %v411 = vextract.high.u32 %v409
    %v412 = vmul.u32 %v405, %v396
    %v413 = vadd.s32 %v408, %v410
    %vm414 = vc.u32 %v408, %v410
    %v415 = vadd.s32 %v411, 1
    %v416 = vsel %vm414, %v415, %v411
    %v417 = vadd.s32 %v412, %v416
    %v418 = vadd.s32 %v417, 536870912
    %v419 = vshrl.u32 %v418, 30
    %v420 = vshll.u32 %v419, 30
    %v421 = vsub.s32 %v417, %v420
    %vm422 = vcmp.lt.s32.totalorder %v421, 0
    %v423 = vsub.s32 0, %v421
    %v424 = vsel %vm422, %v423, %v421
    %v425 = vclz %v424
    %v426 = vsub.s32 %v425, 2
    %vm427 = vcmp.gt.s32.totalorder 0, %v426
    %v428 = vsel %vm427, 0, %v426
    %v429 = vsub.s32 32, %v428
    %v430 = vshll.u32 %v421, %v428
    %v431 = vshrl.u32 %v413, %v429
    %v432 = vor.u32 %v430, %v431
    %v433 = vsub.s32 4294967266, %v428
    %v434 = vadd.s32 %v433, 127
    %v435 = vshll.u32 %v434, 23
    %v436 = vor.u32 4788187, %v435
    %v437 = vand.u32 2147483647, %v436
    %v439 = vcvt.s32.f32 %v432
    %v440 = vmul.f32 %v439, %v437
    %v441 = vxor.u32 %v440, 2147483648
    %v442 = vsel %vm359, %v441, %v440
    %v443 = vsub.s32 4, %v419
    %v444 = vsel %vm359, %v443, %v419
    %v445 = vsel %vm358, %v238, %v442
    %v446 = vsel %vm358, 0, %v444
    %v447 = vcosq.f32.pop %v445
    %v448 = vsinq.f32.pop %v445
    %vm449 = vweird.f32 %v238
    %v450 = vadd.s32 %v446, 3
    %v451 = vand.u32 %v450, 3
    %vm452 = vcmp.lt.s32.totalorder %v451, 2
    %vm453 = vcmp.eq.s32.totalorder %v451, 0
    %v454 = vxor.u32 %v448, 2147483648
    %v455 = vsel %vm453, %v447, %v454
    %vm456 = vcmp.eq.s32.totalorder %v451, 2
    %v457 = vxor.u32 %v447, 2147483648
    %v458 = vsel %vm456, %v457, %v448
    %v459 = vsel %vm452, %v455, %v458
    %v460 = vsel %vm449, nan, %v459
    %v461 = vand.u32 2147483647, %v239
    %vm462 = vcmp.le.f32.partialorder %v461, 0.7853982
    %vm463 = vcmp.lt.s32.totalorder %v239, 0
    %v464 = vand.u32 %v239, 2139095040
    %v465 = vshrl.u32 %v464, 23
    %v466 = vsub.s32 %v465, 127
    %v467 = vand.u32 2147483647, %v239
    %v468 = vand.u32 %v467, 8388607
    %v469 = vor.u32 %v468, 8388608
    %v470 = vsub.s32 0, %v469
    %v471 = vadd.s32 %v466, 1
    %vm472 = vcmp.gt.s32.totalorder %v471, 0
    %v473 = vsel %vm472, %v471, 0
    %v474 = vshrl.u32 %v473, 5
    %v475 = vand.u32 %v473, 31
    %v476 = vsub.s32 32, %v475
    %v477 = vshrl.u32 683565275, %v476
    %v478 = vshll.u32 683565275, %v475
    %v479 = vshrl.u32 2475754826, %v476
    %v480 = vor.u32 %v478, %v479
    %v481 = vshll.u32 2475754826, %v475
    %v482 = vshrl.u32 2131351028, %v476
    %v483 = vor.u32 %v481, %v482
    %v484 = vshll.u32 2131351028, %v475
    %v485 = vshrl.u32 2102212464, %v476
    %v486 = vor.u32 %v484, %v485
    %v487 = vshll.u32 2102212464, %v475
    %v488 = vshrl.u32 920167782, %v476
    %v489 = vor.u32 %v487, %v488
    %v490 = vshll.u32 920167782, %v475
    %v491 = vshrl.u32 1326507024, %v476
    %v492 = vor.u32 %v490, %v491
    %vm493 = vcmp.lt.s32.totalorder %v474, 1
    %vm494 = vcmp.lt.s32.totalorder %v474, 2
    %vm495 = vcmp.lt.s32.totalorder %v474, 3
    %vm496 = vcmp.lt.s32.totalorder %v474, 4
    %v497 = vsel %vm493, %v477, %v480
    %v498 = vsel %vm496, %v486, 2102212464
    %v499 = vsel %vm495, %v483, %v498
    %v500 = vsel %vm494, %v497, %v499
    %v501 = vsel %vm493, %v480, %v483
    %v502 = vsel %vm496, %v489, 920167782
    %v503 = vsel %vm495, %v486, %v502
    %v504 = vsel %vm494, %v501, %v503
    %v505 = vsel %vm493, %v483, %v486
    %v506 = vsel %vm496, %v492, 1326507024
    %v507 = vsel %vm495, %v489, %v506
    %v508 = vsel %vm494, %v505, %v507
    %v509 = vshll.u32 %v469, 8
    %v510 = vmul.u32.u64.compose %v509, %v508
    %v511 = vextract.low.u32 %v510
    %v512 = vextract.high.u32 %v510
    %v513 = vmul.u32.u64.compose %v509, %v504
    %v514 = vextract.low.u32 %v513
    %v515 = vextract.high.u32 %v513
    %v516 = vmul.u32 %v509, %v500
    %v517 = vadd.s32 %v512, %v514
    %vm518 = vc.u32 %v512, %v514
    %v519 = vadd.s32 %v515, 1
    %v520 = vsel %vm518, %v519, %v515
    %v521 = vadd.s32 %v516, %v520
    %v522 = vadd.s32 %v521, 536870912
    %v523 = vshrl.u32 %v522, 30
    %v524 = vshll.u32 %v523, 30
    %v525 = vsub.s32 %v521, %v524
    %vm526 = vcmp.lt.s32.totalorder %v525, 0
    %v527 = vsub.s32 0, %v525
    %v528 = vsel %vm526, %v527, %v525
    %v529 = vclz %v528
    %v530 = vsub.s32 %v529, 2
    %vm531 = vcmp.gt.s32.totalorder 0, %v530
    %v532 = vsel %vm531, 0, %v530
    %v533 = vsub.s32 32, %v532
    %v534 = vshll.u32 %v525, %v532
    %v535 = vshrl.u32 %v517, %v533
    %v536 = vor.u32 %v534, %v535
    %v537 = vsub.s32 4294967266, %v532
    %v538 = vadd.s32 %v537, 127
    %v539 = vshll.u32 %v538, 23
    %v540 = vor.u32 4788187, %v539
    %v541 = vand.u32 2147483647, %v540
    %v543 = vcvt.s32.f32 %v536
    %v544 = vmul.f32 %v543, %v541
    %v545 = vxor.u32 %v544, 2147483648
    %v546 = vsel %vm463, %v545, %v544
    %v547 = vsub.s32 4, %v523
    %v548 = vsel %vm463, %v547, %v523
    %v549 = vsel %vm462, %v239, %v546
    %v550 = vsel %vm462, 0, %v548
    %v551 = vcosq.f32.pop %v549
    %v552 = vsinq.f32.pop %v549
    %vm553 = vweird.f32 %v239
    %v554 = vadd.s32 %v550, 3
    %v555 = vand.u32 %v554, 3
    %vm556 = vcmp.lt.s32.totalorder %v555, 2
    %vm557 = vcmp.eq.s32.totalorder %v555, 0
    %v558 = vxor.u32 %v552, 2147483648
    %v559 = vsel %vm557, %v551, %v558
    %vm560 = vcmp.eq.s32.totalorder %v555, 2
    %v561 = vxor.u32 %v551, 2147483648
    %v562 = vsel %vm560, %v561, %v552
    %v563 = vsel %vm556, %v559, %v562
    %v564 = vsel %vm553, nan, %v563
    %v565 = vand.u32 2147483647, %v240
    %vm566 = vcmp.le.f32.partialorder %v565, 0.7853982
    %vm567 = vcmp.lt.s32.totalorder %v240, 0
    %v568 = vand.u32 %v240, 2139095040
    %v569 = vshrl.u32 %v568, 23
    %v570 = vsub.s32 %v569, 127
    %v571 = vand.u32 2147483647, %v240
    %v572 = vand.u32 %v571, 8388607
    %v573 = vor.u32 %v572, 8388608
    %v574 = vsub.s32 0, %v573
    %v575 = vadd.s32 %v570, 1
    %vm576 = vcmp.gt.s32.totalorder %v575, 0
    %v577 = vsel %vm576, %v575, 0
    %v578 = vshrl.u32 %v577, 5
    %v579 = vand.u32 %v577, 31
    %v580 = vsub.s32 32, %v579
    %v581 = vshrl.u32 683565275, %v580
    %v582 = vshll.u32 683565275, %v579
    %v583 = vshrl.u32 2475754826, %v580
    %v584 = vor.u32 %v582, %v583
    %v585 = vshll.u32 2475754826, %v579
    %v586 = vshrl.u32 2131351028, %v580
    %v587 = vor.u32 %v585, %v586
    %v588 = vshll.u32 2131351028, %v579
    %v589 = vshrl.u32 2102212464, %v580
    %v590 = vor.u32 %v588, %v589
    %v591 = vshll.u32 2102212464, %v579
    %v592 = vshrl.u32 920167782, %v580
    %v593 = vor.u32 %v591, %v592
    %v594 = vshll.u32 920167782, %v579
    %v595 = vshrl.u32 1326507024, %v580
    %v596 = vor.u32 %v594, %v595
    %vm597 = vcmp.lt.s32.totalorder %v578, 1
    %vm598 = vcmp.lt.s32.totalorder %v578, 2
    %vm599 = vcmp.lt.s32.totalorder %v578, 3
    %vm600 = vcmp.lt.s32.totalorder %v578, 4
    %v601 = vsel %vm597, %v581, %v584
    %v602 = vsel %vm600, %v590, 2102212464
    %v603 = vsel %vm599, %v587, %v602
    %v604 = vsel %vm598, %v601, %v603
    %v605 = vsel %vm597, %v584, %v587
    %v606 = vsel %vm600, %v593, 920167782
    %v607 = vsel %vm599, %v590, %v606
    %v608 = vsel %vm598, %v605, %v607
    %v609 = vsel %vm597, %v587, %v590
    %v610 = vsel %vm600, %v596, 1326507024
    %v611 = vsel %vm599, %v593, %v610
    %v612 = vsel %vm598, %v609, %v611
    %v613 = vshll.u32 %v573, 8
    %v614 = vmul.u32.u64.compose %v613, %v612
    %v615 = vextract.low.u32 %v614
    %v616 = vextract.high.u32 %v614
    %v617 = vmul.u32.u64.compose %v613, %v608
    %v618 = vextract.low.u32 %v617
    %v619 = vextract.high.u32 %v617
    %v620 = vmul.u32 %v613, %v604
    %v621 = vadd.s32 %v616, %v618
    %vm622 = vc.u32 %v616, %v618
    %v623 = vadd.s32 %v619, 1
    %v624 = vsel %vm622, %v623, %v619
    %v625 = vadd.s32 %v620, %v624
    %v626 = vadd.s32 %v625, 536870912
    %v627 = vshrl.u32 %v626, 30
    %v628 = vshll.u32 %v627, 30
    %v629 = vsub.s32 %v625, %v628
    %vm630 = vcmp.lt.s32.totalorder %v629, 0
    %v631 = vsub.s32 0, %v629
    %v632 = vsel %vm630, %v631, %v629
    %v633 = vclz %v632
    %v634 = vsub.s32 %v633, 2
    %vm635 = vcmp.gt.s32.totalorder 0, %v634
    %v636 = vsel %vm635, 0, %v634
    %v637 = vsub.s32 32, %v636
    %v638 = vshll.u32 %v629, %v636
    %v639 = vshrl.u32 %v621, %v637
    %v640 = vor.u32 %v638, %v639
    %v641 = vsub.s32 4294967266, %v636
    %v642 = vadd.s32 %v641, 127
    %v643 = vshll.u32 %v642, 23
    %v644 = vor.u32 4788187, %v643
    %v645 = vand.u32 2147483647, %v644
    %v647 = vcvt.s32.f32 %v640
    %v648 = vmul.f32 %v647, %v645
    %v649 = vxor.u32 %v648, 2147483648
    %v650 = vsel %vm567, %v649, %v648
    %v651 = vsub.s32 4, %v627
    %v652 = vsel %vm567, %v651, %v627
    %v653 = vsel %vm566, %v240, %v650
    %v654 = vsel %vm566, 0, %v652
    %v655 = vcosq.f32.pop %v653
    %v656 = vsinq.f32.pop %v653
    %vm657 = vweird.f32 %v240
    %v658 = vadd.s32 %v654, 3
    %v659 = vand.u32 %v658, 3
    %vm660 = vcmp.lt.s32.totalorder %v659, 2
    %vm661 = vcmp.eq.s32.totalorder %v659, 0
    %v662 = vxor.u32 %v656, 2147483648
    %v663 = vsel %vm661, %v655, %v662
    %vm664 = vcmp.eq.s32.totalorder %v659, 2
    %v665 = vxor.u32 %v655, 2147483648
    %v666 = vsel %vm664, %v665, %v656
    %v667 = vsel %vm660, %v663, %v666
    %v668 = vsel %vm657, nan, %v667
    %v669 = vand.u32 2147483647, %v241
    %vm670 = vcmp.le.f32.partialorder %v669, 0.7853982
    %vm671 = vcmp.lt.s32.totalorder %v241, 0
    %v672 = vand.u32 %v241, 2139095040
    %v673 = vshrl.u32 %v672, 23
    %v674 = vsub.s32 %v673, 127
    %v675 = vand.u32 2147483647, %v241
    %v676 = vand.u32 %v675, 8388607
    %v677 = vor.u32 %v676, 8388608
    %v678 = vsub.s32 0, %v677
    %v679 = vadd.s32 %v674, 1
    %vm680 = vcmp.gt.s32.totalorder %v679, 0
    %v681 = vsel %vm680, %v679, 0
    %v682 = vshrl.u32 %v681, 5
    %v683 = vand.u32 %v681, 31
    %v684 = vsub.s32 32, %v683
    %v685 = vshrl.u32 683565275, %v684
    %v686 = vshll.u32 683565275, %v683
    %v687 = vshrl.u32 2475754826, %v684
    %v688 = vor.u32 %v686, %v687
    %v689 = vshll.u32 2475754826, %v683
    %v690 = vshrl.u32 2131351028, %v684
    %v691 = vor.u32 %v689, %v690
    %v692 = vshll.u32 2131351028, %v683
    %v693 = vshrl.u32 2102212464, %v684
    %v694 = vor.u32 %v692, %v693
    %v695 = vshll.u32 2102212464, %v683
    %v696 = vshrl.u32 920167782, %v684
    %v697 = vor.u32 %v695, %v696
    %v698 = vshll.u32 920167782, %v683
    %v699 = vshrl.u32 1326507024, %v684
    %v700 = vor.u32 %v698, %v699
    %vm701 = vcmp.lt.s32.totalorder %v682, 1
    %vm702 = vcmp.lt.s32.totalorder %v682, 2
    %vm703 = vcmp.lt.s32.totalorder %v682, 3
    %vm704 = vcmp.lt.s32.totalorder %v682, 4
    %v705 = vsel %vm701, %v685, %v688
    %v706 = vsel %vm704, %v694, 2102212464
    %v707 = vsel %vm703, %v691, %v706
    %v708 = vsel %vm702, %v705, %v707
    %v709 = vsel %vm701, %v688, %v691
    %v710 = vsel %vm704, %v697, 920167782
    %v711 = vsel %vm703, %v694, %v710
    %v712 = vsel %vm702, %v709, %v711
    %v713 = vsel %vm701, %v691, %v694
    %v714 = vsel %vm704, %v700, 1326507024
    %v715 = vsel %vm703, %v697, %v714
    %v716 = vsel %vm702, %v713, %v715
    %v717 = vshll.u32 %v677, 8
    %v718 = vmul.u32.u64.compose %v717, %v716
    %v719 = vextract.low.u32 %v718
    %v720 = vextract.high.u32 %v718
    %v721 = vmul.u32.u64.compose %v717, %v712
    %v722 = vextract.low.u32 %v721
    %v723 = vextract.high.u32 %v721
    %v724 = vmul.u32 %v717, %v708
    %v725 = vadd.s32 %v720, %v722
    %vm726 = vc.u32 %v720, %v722
    %v727 = vadd.s32 %v723, 1
    %v728 = vsel %vm726, %v727, %v723
    %v729 = vadd.s32 %v724, %v728
    %v730 = vadd.s32 %v729, 536870912
    %v731 = vshrl.u32 %v730, 30
    %v732 = vshll.u32 %v731, 30
    %v733 = vsub.s32 %v729, %v732
    %vm734 = vcmp.lt.s32.totalorder %v733, 0
    %v735 = vsub.s32 0, %v733
    %v736 = vsel %vm734, %v735, %v733
    %v737 = vclz %v736
    %v738 = vsub.s32 %v737, 2
    %vm739 = vcmp.gt.s32.totalorder 0, %v738
    %v740 = vsel %vm739, 0, %v738
    %v741 = vsub.s32 32, %v740
    %v742 = vshll.u32 %v733, %v740
    %v743 = vshrl.u32 %v725, %v741
    %v744 = vor.u32 %v742, %v743
    %v745 = vsub.s32 4294967266, %v740
    %v746 = vadd.s32 %v745, 127
    %v747 = vshll.u32 %v746, 23
    %v748 = vor.u32 4788187, %v747
    %v749 = vand.u32 2147483647, %v748
    %v751 = vcvt.s32.f32 %v744
    %v752 = vmul.f32 %v751, %v749
    %v753 = vxor.u32 %v752, 2147483648
    %v754 = vsel %vm671, %v753, %v752
    %v755 = vsub.s32 4, %v731
    %v756 = vsel %vm671, %v755, %v731
    %v757 = vsel %vm670, %v241, %v754
    %v758 = vsel %vm670, 0, %v756
    %v759 = vcosq.f32.pop %v757
    %v760 = vsinq.f32.pop %v757
    %vm761 = vweird.f32 %v241
    %v762 = vadd.s32 %v758, 3
    %v763 = vand.u32 %v762, 3
    %vm764 = vcmp.lt.s32.totalorder %v763, 2
    %vm765 = vcmp.eq.s32.totalorder %v763, 0
    %v766 = vxor.u32 %v760, 2147483648
    %v767 = vsel %vm765, %v759, %v766
    %vm768 = vcmp.eq.s32.totalorder %v763, 2
    %v769 = vxor.u32 %v759, 2147483648
    %v770 = vsel %vm768, %v769, %v760
    %v771 = vsel %vm764, %v767, %v770
    %v772 = vsel %vm761, nan, %v771
    %v773 = vand.u32 2147483647, %v242
    %vm774 = vcmp.le.f32.partialorder %v773, 0.7853982
    %vm775 = vcmp.lt.s32.totalorder %v242, 0
    %v776 = vand.u32 %v242, 2139095040
    %v777 = vshrl.u32 %v776, 23
    %v778 = vsub.s32 %v777, 127
    %v779 = vand.u32 2147483647, %v242
    %v780 = vand.u32 %v779, 8388607
    %v781 = vor.u32 %v780, 8388608
    %v782 = vsub.s32 0, %v781
    %v783 = vadd.s32 %v778, 1
    %vm784 = vcmp.gt.s32.totalorder %v783, 0
    %v785 = vsel %vm784, %v783, 0
    %v786 = vshrl.u32 %v785, 5
    %v787 = vand.u32 %v785, 31
    %v788 = vsub.s32 32, %v787
    %v789 = vshrl.u32 683565275, %v788
    %v790 = vshll.u32 683565275, %v787
    %v791 = vshrl.u32 2475754826, %v788
    %v792 = vor.u32 %v790, %v791
    %v793 = vshll.u32 2475754826, %v787
    %v794 = vshrl.u32 2131351028, %v788
    %v795 = vor.u32 %v793, %v794
    %v796 = vshll.u32 2131351028, %v787
    %v797 = vshrl.u32 2102212464, %v788
    %v798 = vor.u32 %v796, %v797
    %v799 = vshll.u32 2102212464, %v787
    %v800 = vshrl.u32 920167782, %v788
    %v801 = vor.u32 %v799, %v800
    %v802 = vshll.u32 920167782, %v787
    %v803 = vshrl.u32 1326507024, %v788
    %v804 = vor.u32 %v802, %v803
    %vm805 = vcmp.lt.s32.totalorder %v786, 1
    %vm806 = vcmp.lt.s32.totalorder %v786, 2
    %vm807 = vcmp.lt.s32.totalorder %v786, 3
    %vm808 = vcmp.lt.s32.totalorder %v786, 4
    %v809 = vsel %vm805, %v789, %v792
    %v810 = vsel %vm808, %v798, 2102212464
    %v811 = vsel %vm807, %v795, %v810
    %v812 = vsel %vm806, %v809, %v811
    %v813 = vsel %vm805, %v792, %v795
    %v814 = vsel %vm808, %v801, 920167782
    %v815 = vsel %vm807, %v798, %v814
    %v816 = vsel %vm806, %v813, %v815
    %v817 = vsel %vm805, %v795, %v798
    %v818 = vsel %vm808, %v804, 1326507024
    %v819 = vsel %vm807, %v801, %v818
    %v820 = vsel %vm806, %v817, %v819
    %v821 = vshll.u32 %v781, 8
    %v822 = vmul.u32.u64.compose %v821, %v820
    %v823 = vextract.low.u32 %v822
    %v824 = vextract.high.u32 %v822
    %v825 = vmul.u32.u64.compose %v821, %v816
    %v826 = vextract.low.u32 %v825
    %v827 = vextract.high.u32 %v825
    %v828 = vmul.u32 %v821, %v812
    %v829 = vadd.s32 %v824, %v826
    %vm830 = vc.u32 %v824, %v826
    %v831 = vadd.s32 %v827, 1
    %v832 = vsel %vm830, %v831, %v827
    %v833 = vadd.s32 %v828, %v832
    %v834 = vadd.s32 %v833, 536870912
    %v835 = vshrl.u32 %v834, 30
    %v836 = vshll.u32 %v835, 30
    %v837 = vsub.s32 %v833, %v836
    %vm838 = vcmp.lt.s32.totalorder %v837, 0
    %v839 = vsub.s32 0, %v837
    %v840 = vsel %vm838, %v839, %v837
    %v841 = vclz %v840
    %v842 = vsub.s32 %v841, 2
    %vm843 = vcmp.gt.s32.totalorder 0, %v842
    %v844 = vsel %vm843, 0, %v842
    %v845 = vsub.s32 32, %v844
    %v846 = vshll.u32 %v837, %v844
    %v847 = vshrl.u32 %v829, %v845
    %v848 = vor.u32 %v846, %v847
    %v849 = vsub.s32 4294967266, %v844
    %v850 = vadd.s32 %v849, 127
    %v851 = vshll.u32 %v850, 23
    %v852 = vor.u32 4788187, %v851
    %v853 = vand.u32 2147483647, %v852
    %v855 = vcvt.s32.f32 %v848
    %v856 = vmul.f32 %v855, %v853
    %v857 = vxor.u32 %v856, 2147483648
    %v858 = vsel %vm775, %v857, %v856
    %v859 = vsub.s32 4, %v835
    %v860 = vsel %vm775, %v859, %v835
    %v861 = vsel %vm774, %v242, %v858
    %v862 = vsel %vm774, 0, %v860
    %v863 = vcosq.f32.pop %v861
    %v864 = vsinq.f32.pop %v861
    %vm865 = vweird.f32 %v242
    %v866 = vadd.s32 %v862, 3
    %v867 = vand.u32 %v866, 3
    %vm868 = vcmp.lt.s32.totalorder %v867, 2
    %vm869 = vcmp.eq.s32.totalorder %v867, 0
    %v870 = vxor.u32 %v864, 2147483648
    %v871 = vsel %vm869, %v863, %v870
    %vm872 = vcmp.eq.s32.totalorder %v867, 2
    %v873 = vxor.u32 %v863, 2147483648
    %v874 = vsel %vm872, %v873, %v864
    %v875 = vsel %vm868, %v871, %v874
    %v876 = vsel %vm865, nan, %v875
    %v877 = vand.u32 2147483647, %v243
    %vm878 = vcmp.le.f32.partialorder %v877, 0.7853982
    %vm879 = vcmp.lt.s32.totalorder %v243, 0
    %v880 = vand.u32 %v243, 2139095040
    %v881 = vshrl.u32 %v880, 23
    %v882 = vsub.s32 %v881, 127
    %v883 = vand.u32 2147483647, %v243
    %v884 = vand.u32 %v883, 8388607
    %v885 = vor.u32 %v884, 8388608
    %v886 = vsub.s32 0, %v885
    %v887 = vadd.s32 %v882, 1
    %vm888 = vcmp.gt.s32.totalorder %v887, 0
    %v889 = vsel %vm888, %v887, 0
    %v890 = vshrl.u32 %v889, 5
    %v891 = vand.u32 %v889, 31
    %v892 = vsub.s32 32, %v891
    %v893 = vshrl.u32 683565275, %v892
    %v894 = vshll.u32 683565275, %v891
    %v895 = vshrl.u32 2475754826, %v892
    %v896 = vor.u32 %v894, %v895
    %v897 = vshll.u32 2475754826, %v891
    %v898 = vshrl.u32 2131351028, %v892
    %v899 = vor.u32 %v897, %v898
    %v900 = vshll.u32 2131351028, %v891
    %v901 = vshrl.u32 2102212464, %v892
    %v902 = vor.u32 %v900, %v901
    %v903 = vshll.u32 2102212464, %v891
    %v904 = vshrl.u32 920167782, %v892
    %v905 = vor.u32 %v903, %v904
    %v906 = vshll.u32 920167782, %v891
    %v907 = vshrl.u32 1326507024, %v892
    %v908 = vor.u32 %v906, %v907
    %vm909 = vcmp.lt.s32.totalorder %v890, 1
    %vm910 = vcmp.lt.s32.totalorder %v890, 2
    %vm911 = vcmp.lt.s32.totalorder %v890, 3
    %vm912 = vcmp.lt.s32.totalorder %v890, 4
    %v913 = vsel %vm909, %v893, %v896
    %v914 = vsel %vm912, %v902, 2102212464
    %v915 = vsel %vm911, %v899, %v914
    %v916 = vsel %vm910, %v913, %v915
    %v917 = vsel %vm909, %v896, %v899
    %v918 = vsel %vm912, %v905, 920167782
    %v919 = vsel %vm911, %v902, %v918
    %v920 = vsel %vm910, %v917, %v919
    %v921 = vsel %vm909, %v899, %v902
    %v922 = vsel %vm912, %v908, 1326507024
    %v923 = vsel %vm911, %v905, %v922
    %v924 = vsel %vm910, %v921, %v923
    %v925 = vshll.u32 %v885, 8
    %v926 = vmul.u32.u64.compose %v925, %v924
    %v927 = vextract.low.u32 %v926
    %v928 = vextract.high.u32 %v926
    %v929 = vmul.u32.u64.compose %v925, %v920
    %v930 = vextract.low.u32 %v929
    %v931 = vextract.high.u32 %v929
    %v932 = vmul.u32 %v925, %v916
    %v933 = vadd.s32 %v928, %v930
    %vm934 = vc.u32 %v928, %v930
    %v935 = vadd.s32 %v931, 1
    %v936 = vsel %vm934, %v935, %v931
    %v937 = vadd.s32 %v932, %v936
    %v938 = vadd.s32 %v937, 536870912
    %v939 = vshrl.u32 %v938, 30
    %v940 = vshll.u32 %v939, 30
    %v941 = vsub.s32 %v937, %v940
    %vm942 = vcmp.lt.s32.totalorder %v941, 0
    %v943 = vsub.s32 0, %v941
    %v944 = vsel %vm942, %v943, %v941
    %v945 = vclz %v944
    %v946 = vsub.s32 %v945, 2
    %vm947 = vcmp.gt.s32.totalorder 0, %v946
    %v948 = vsel %vm947, 0, %v946
    %v949 = vsub.s32 32, %v948
    %v950 = vshll.u32 %v941, %v948
    %v951 = vshrl.u32 %v933, %v949
    %v952 = vor.u32 %v950, %v951
    %v953 = vsub.s32 4294967266, %v948
    %v954 = vadd.s32 %v953, 127
    %v955 = vshll.u32 %v954, 23
    %v956 = vor.u32 4788187, %v955
    %v957 = vand.u32 2147483647, %v956
    %v959 = vcvt.s32.f32 %v952
    %v960 = vmul.f32 %v959, %v957
    %v961 = vxor.u32 %v960, 2147483648
    %v962 = vsel %vm879, %v961, %v960
    %v963 = vsub.s32 4, %v939
    %v964 = vsel %vm879, %v963, %v939
    %v965 = vsel %vm878, %v243, %v962
    %v966 = vsel %vm878, 0, %v964
    %v967 = vcosq.f32.pop %v965
    %v968 = vsinq.f32.pop %v965
    %vm969 = vweird.f32 %v243
    %v970 = vadd.s32 %v966, 3
    %v971 = vand.u32 %v970, 3
    %vm972 = vcmp.lt.s32.totalorder %v971, 2
    %vm973 = vcmp.eq.s32.totalorder %v971, 0
    %v974 = vxor.u32 %v968, 2147483648
    %v975 = vsel %vm973, %v967, %v974
    %vm976 = vcmp.eq.s32.totalorder %v971, 2
    %v977 = vxor.u32 %v967, 2147483648
    %v978 = vsel %vm976, %v977, %v968
    %v979 = vsel %vm972, %v975, %v978
    %v980 = vsel %vm969, nan, %v979
    %v981 = vand.u32 2147483647, %v244
    %vm982 = vcmp.le.f32.partialorder %v981, 0.7853982
    %vm983 = vcmp.lt.s32.totalorder %v244, 0
    %v984 = vand.u32 %v244, 2139095040
    %v985 = vshrl.u32 %v984, 23
    %v986 = vsub.s32 %v985, 127
    %v987 = vand.u32 2147483647, %v244
    %v988 = vand.u32 %v987, 8388607
    %v989 = vor.u32 %v988, 8388608
    %v990 = vsub.s32 0, %v989
    %v991 = vadd.s32 %v986, 1
    %vm992 = vcmp.gt.s32.totalorder %v991, 0
    %v993 = vsel %vm992, %v991, 0
    %v994 = vshrl.u32 %v993, 5
    %v995 = vand.u32 %v993, 31
    %v996 = vsub.s32 32, %v995
    %v997 = vshrl.u32 683565275, %v996
    %v998 = vshll.u32 683565275, %v995
    %v999 = vshrl.u32 2475754826, %v996
    %v1000 = vor.u32 %v998, %v999
    %v1001 = vshll.u32 2475754826, %v995
    %v1002 = vshrl.u32 2131351028, %v996
    %v1003 = vor.u32 %v1001, %v1002
    %v1004 = vshll.u32 2131351028, %v995
    %v1005 = vshrl.u32 2102212464, %v996
    %v1006 = vor.u32 %v1004, %v1005
    %v1007 = vshll.u32 2102212464, %v995
    %v1008 = vshrl.u32 920167782, %v996
    %v1009 = vor.u32 %v1007, %v1008
    %v1010 = vshll.u32 920167782, %v995
    %v1011 = vshrl.u32 1326507024, %v996
    %v1012 = vor.u32 %v1010, %v1011
    %vm1013 = vcmp.lt.s32.totalorder %v994, 1
    %vm1014 = vcmp.lt.s32.totalorder %v994, 2
    %vm1015 = vcmp.lt.s32.totalorder %v994, 3
    %vm1016 = vcmp.lt.s32.totalorder %v994, 4
    %v1017 = vsel %vm1013, %v997, %v1000
    %v1018 = vsel %vm1016, %v1006, 2102212464
    %v1019 = vsel %vm1015, %v1003, %v1018
    %v1020 = vsel %vm1014, %v1017, %v1019
    %v1021 = vsel %vm1013, %v1000, %v1003
    %v1022 = vsel %vm1016, %v1009, 920167782
    %v1023 = vsel %vm1015, %v1006, %v1022
    %v1024 = vsel %vm1014, %v1021, %v1023
    %v1025 = vsel %vm1013, %v1003, %v1006
    %v1026 = vsel %vm1016, %v1012, 1326507024
    %v1027 = vsel %vm1015, %v1009, %v1026
    %v1028 = vsel %vm1014, %v1025, %v1027
    %v1029 = vshll.u32 %v989, 8
    %v1030 = vmul.u32.u64.compose %v1029, %v1028
    %v1031 = vextract.low.u32 %v1030
    %v1032 = vextract.high.u32 %v1030
    %v1033 = vmul.u32.u64.compose %v1029, %v1024
    %v1034 = vextract.low.u32 %v1033
    %v1035 = vextract.high.u32 %v1033
    %v1036 = vmul.u32 %v1029, %v1020
    %v1037 = vadd.s32 %v1032, %v1034
    %vm1038 = vc.u32 %v1032, %v1034
    %v1039 = vadd.s32 %v1035, 1
    %v1040 = vsel %vm1038, %v1039, %v1035
    %v1041 = vadd.s32 %v1036, %v1040
    %v1042 = vadd.s32 %v1041, 536870912
    %v1043 = vshrl.u32 %v1042, 30
    %v1044 = vshll.u32 %v1043, 30
    %v1045 = vsub.s32 %v1041, %v1044
    %vm1046 = vcmp.lt.s32.totalorder %v1045, 0
    %v1047 = vsub.s32 0, %v1045
    %v1048 = vsel %vm1046, %v1047, %v1045
    %v1049 = vclz %v1048
    %v1050 = vsub.s32 %v1049, 2
    %vm1051 = vcmp.gt.s32.totalorder 0, %v1050
    %v1052 = vsel %vm1051, 0, %v1050
    %v1053 = vsub.s32 32, %v1052
    %v1054 = vshll.u32 %v1045, %v1052
    %v1055 = vshrl.u32 %v1037, %v1053
    %v1056 = vor.u32 %v1054, %v1055
    %v1057 = vsub.s32 4294967266, %v1052
    %v1058 = vadd.s32 %v1057, 127
    %v1059 = vshll.u32 %v1058, 23
    %v1060 = vor.u32 4788187, %v1059
    %v1061 = vand.u32 2147483647, %v1060
    %v1063 = vcvt.s32.f32 %v1056
    %v1064 = vmul.f32 %v1063, %v1061
    %v1065 = vxor.u32 %v1064, 2147483648
    %v1066 = vsel %vm983, %v1065, %v1064
    %v1067 = vsub.s32 4, %v1043
    %v1068 = vsel %vm983, %v1067, %v1043
    %v1069 = vsel %vm982, %v244, %v1066
    %v1070 = vsel %vm982, 0, %v1068
    %v1071 = vcosq.f32.pop %v1069
    %v1072 = vsinq.f32.pop %v1069
    %vm1073 = vweird.f32 %v244
    %v1074 = vadd.s32 %v1070, 3
    %v1075 = vand.u32 %v1074, 3
    %vm1076 = vcmp.lt.s32.totalorder %v1075, 2
    %vm1077 = vcmp.eq.s32.totalorder %v1075, 0
    %v1078 = vxor.u32 %v1072, 2147483648
    %v1079 = vsel %vm1077, %v1071, %v1078
    %vm1080 = vcmp.eq.s32.totalorder %v1075, 2
    %v1081 = vxor.u32 %v1071, 2147483648
    %v1082 = vsel %vm1080, %v1081, %v1072
    %v1083 = vsel %vm1076, %v1079, %v1082
    %v1084 = vsel %vm1073, nan, %v1083
    %v1085 = vand.u32 2147483647, %v245
    %vm1086 = vcmp.le.f32.partialorder %v1085, 0.7853982
    %vm1087 = vcmp.lt.s32.totalorder %v245, 0
    %v1088 = vand.u32 %v245, 2139095040
    %v1089 = vshrl.u32 %v1088, 23
    %v1090 = vsub.s32 %v1089, 127
    %v1091 = vand.u32 2147483647, %v245
    %v1092 = vand.u32 %v1091, 8388607
    %v1093 = vor.u32 %v1092, 8388608
    %v1094 = vsub.s32 0, %v1093
    %v1095 = vadd.s32 %v1090, 1
    %vm1096 = vcmp.gt.s32.totalorder %v1095, 0
    %v1097 = vsel %vm1096, %v1095, 0
    %v1098 = vshrl.u32 %v1097, 5
    %v1099 = vand.u32 %v1097, 31
    %v1100 = vsub.s32 32, %v1099
    %v1101 = vshrl.u32 683565275, %v1100
    %v1102 = vshll.u32 683565275, %v1099
    %v1103 = vshrl.u32 2475754826, %v1100
    %v1104 = vor.u32 %v1102, %v1103
    %v1105 = vshll.u32 2475754826, %v1099
    %v1106 = vshrl.u32 2131351028, %v1100
    %v1107 = vor.u32 %v1105, %v1106
    %v1108 = vshll.u32 2131351028, %v1099
    %v1109 = vshrl.u32 2102212464, %v1100
    %v1110 = vor.u32 %v1108, %v1109
    %v1111 = vshll.u32 2102212464, %v1099
    %v1112 = vshrl.u32 920167782, %v1100
    %v1113 = vor.u32 %v1111, %v1112
    %v1114 = vshll.u32 920167782, %v1099
    %v1115 = vshrl.u32 1326507024, %v1100
    %v1116 = vor.u32 %v1114, %v1115
    %vm1117 = vcmp.lt.s32.totalorder %v1098, 1
    %vm1118 = vcmp.lt.s32.totalorder %v1098, 2
    %vm1119 = vcmp.lt.s32.totalorder %v1098, 3
    %vm1120 = vcmp.lt.s32.totalorder %v1098, 4
    %v1121 = vsel %vm1117, %v1101, %v1104
    %v1122 = vsel %vm1120, %v1110, 2102212464
    %v1123 = vsel %vm1119, %v1107, %v1122
    %v1124 = vsel %vm1118, %v1121, %v1123
    %v1125 = vsel %vm1117, %v1104, %v1107
    %v1126 = vsel %vm1120, %v1113, 920167782
    %v1127 = vsel %vm1119, %v1110, %v1126
    %v1128 = vsel %vm1118, %v1125, %v1127
    %v1129 = vsel %vm1117, %v1107, %v1110
    %v1130 = vsel %vm1120, %v1116, 1326507024
    %v1131 = vsel %vm1119, %v1113, %v1130
    %v1132 = vsel %vm1118, %v1129, %v1131
    %v1133 = vshll.u32 %v1093, 8
    %v1134 = vmul.u32.u64.compose %v1133, %v1132
    %v1135 = vextract.low.u32 %v1134
    %v1136 = vextract.high.u32 %v1134
    %v1137 = vmul.u32.u64.compose %v1133, %v1128
    %v1138 = vextract.low.u32 %v1137
    %v1139 = vextract.high.u32 %v1137
    %v1140 = vmul.u32 %v1133, %v1124
    %v1141 = vadd.s32 %v1136, %v1138
    %vm1142 = vc.u32 %v1136, %v1138
    %v1143 = vadd.s32 %v1139, 1
    %v1144 = vsel %vm1142, %v1143, %v1139
    %v1145 = vadd.s32 %v1140, %v1144
    %v1146 = vadd.s32 %v1145, 536870912
    %v1147 = vshrl.u32 %v1146, 30
    %v1148 = vshll.u32 %v1147, 30
    %v1149 = vsub.s32 %v1145, %v1148
    %vm1150 = vcmp.lt.s32.totalorder %v1149, 0
    %v1151 = vsub.s32 0, %v1149
    %v1152 = vsel %vm1150, %v1151, %v1149
    %v1153 = vclz %v1152
    %v1154 = vsub.s32 %v1153, 2
    %vm1155 = vcmp.gt.s32.totalorder 0, %v1154
    %v1156 = vsel %vm1155, 0, %v1154
    %v1157 = vsub.s32 32, %v1156
    %v1158 = vshll.u32 %v1149, %v1156
    %v1159 = vshrl.u32 %v1141, %v1157
    %v1160 = vor.u32 %v1158, %v1159
    %v1161 = vsub.s32 4294967266, %v1156
    %v1162 = vadd.s32 %v1161, 127
    %v1163 = vshll.u32 %v1162, 23
    %v1164 = vor.u32 4788187, %v1163
    %v1165 = vand.u32 2147483647, %v1164
    %v1167 = vcvt.s32.f32 %v1160
    %v1168 = vmul.f32 %v1167, %v1165
    %v1169 = vxor.u32 %v1168, 2147483648
    %v1170 = vsel %vm1087, %v1169, %v1168
    %v1171 = vsub.s32 4, %v1147
    %v1172 = vsel %vm1087, %v1171, %v1147
    %v1173 = vsel %vm1086, %v245, %v1170
    %v1174 = vsel %vm1086, 0, %v1172
    %v1175 = vcosq.f32.pop %v1173
    %v1176 = vsinq.f32.pop %v1173
    %vm1177 = vweird.f32 %v245
    %v1178 = vadd.s32 %v1174, 3
    %v1179 = vand.u32 %v1178, 3
    %vm1180 = vcmp.lt.s32.totalorder %v1179, 2
    %vm1181 = vcmp.eq.s32.totalorder %v1179, 0
    %v1182 = vxor.u32 %v1176, 2147483648
    %v1183 = vsel %vm1181, %v1175, %v1182
    %vm1184 = vcmp.eq.s32.totalorder %v1179, 2
    %v1185 = vxor.u32 %v1175, 2147483648
    %v1186 = vsel %vm1184, %v1185, %v1176
    %v1187 = vsel %vm1180, %v1183, %v1186
    %v1188 = vsel %vm1177, nan, %v1187
    %v1189 = vand.u32 2147483647, %v246
    %vm1190 = vcmp.le.f32.partialorder %v1189, 0.7853982
    %vm1191 = vcmp.lt.s32.totalorder %v246, 0
    %v1192 = vand.u32 %v246, 2139095040
    %v1193 = vshrl.u32 %v1192, 23
    %v1194 = vsub.s32 %v1193, 127
    %v1195 = vand.u32 2147483647, %v246
    %v1196 = vand.u32 %v1195, 8388607
    %v1197 = vor.u32 %v1196, 8388608
    %v1198 = vsub.s32 0, %v1197
    %v1199 = vadd.s32 %v1194, 1
    %vm1200 = vcmp.gt.s32.totalorder %v1199, 0
    %v1201 = vsel %vm1200, %v1199, 0
    %v1202 = vshrl.u32 %v1201, 5
    %v1203 = vand.u32 %v1201, 31
    %v1204 = vsub.s32 32, %v1203
    %v1205 = vshrl.u32 683565275, %v1204
    %v1206 = vshll.u32 683565275, %v1203
    %v1207 = vshrl.u32 2475754826, %v1204
    %v1208 = vor.u32 %v1206, %v1207
    %v1209 = vshll.u32 2475754826, %v1203
    %v1210 = vshrl.u32 2131351028, %v1204
    %v1211 = vor.u32 %v1209, %v1210
    %v1212 = vshll.u32 2131351028, %v1203
    %v1213 = vshrl.u32 2102212464, %v1204
    %v1214 = vor.u32 %v1212, %v1213
    %v1215 = vshll.u32 2102212464, %v1203
    %v1216 = vshrl.u32 920167782, %v1204
    %v1217 = vor.u32 %v1215, %v1216
    %v1218 = vshll.u32 920167782, %v1203
    %v1219 = vshrl.u32 1326507024, %v1204
    %v1220 = vor.u32 %v1218, %v1219
    %vm1221 = vcmp.lt.s32.totalorder %v1202, 1
    %vm1222 = vcmp.lt.s32.totalorder %v1202, 2
    %vm1223 = vcmp.lt.s32.totalorder %v1202, 3
    %vm1224 = vcmp.lt.s32.totalorder %v1202, 4
    %v1225 = vsel %vm1221, %v1205, %v1208
    %v1226 = vsel %vm1224, %v1214, 2102212464
    %v1227 = vsel %vm1223, %v1211, %v1226
    %v1228 = vsel %vm1222, %v1225, %v1227
    %v1229 = vsel %vm1221, %v1208, %v1211
    %v1230 = vsel %vm1224, %v1217, 920167782
    %v1231 = vsel %vm1223, %v1214, %v1230
    %v1232 = vsel %vm1222, %v1229, %v1231
    %v1233 = vsel %vm1221, %v1211, %v1214
    %v1234 = vsel %vm1224, %v1220, 1326507024
    %v1235 = vsel %vm1223, %v1217, %v1234
    %v1236 = vsel %vm1222, %v1233, %v1235
    %v1237 = vshll.u32 %v1197, 8
    %v1238 = vmul.u32.u64.compose %v1237, %v1236
    %v1239 = vextract.low.u32 %v1238
    %v1240 = vextract.high.u32 %v1238
    %v1241 = vmul.u32.u64.compose %v1237, %v1232
    %v1242 = vextract.low.u32 %v1241
    %v1243 = vextract.high.u32 %v1241
    %v1244 = vmul.u32 %v1237, %v1228
    %v1245 = vadd.s32 %v1240, %v1242
    %vm1246 = vc.u32 %v1240, %v1242
    %v1247 = vadd.s32 %v1243, 1
    %v1248 = vsel %vm1246, %v1247, %v1243
    %v1249 = vadd.s32 %v1244, %v1248
    %v1250 = vadd.s32 %v1249, 536870912
    %v1251 = vshrl.u32 %v1250, 30
    %v1252 = vshll.u32 %v1251, 30
    %v1253 = vsub.s32 %v1249, %v1252
    %vm1254 = vcmp.lt.s32.totalorder %v1253, 0
    %v1255 = vsub.s32 0, %v1253
    %v1256 = vsel %vm1254, %v1255, %v1253
    %v1257 = vclz %v1256
    %v1258 = vsub.s32 %v1257, 2
    %vm1259 = vcmp.gt.s32.totalorder 0, %v1258
    %v1260 = vsel %vm1259, 0, %v1258
    %v1261 = vsub.s32 32, %v1260
    %v1262 = vshll.u32 %v1253, %v1260
    %v1263 = vshrl.u32 %v1245, %v1261
    %v1264 = vor.u32 %v1262, %v1263
    %v1265 = vsub.s32 4294967266, %v1260
    %v1266 = vadd.s32 %v1265, 127
    %v1267 = vshll.u32 %v1266, 23
    %v1268 = vor.u32 4788187, %v1267
    %v1269 = vand.u32 2147483647, %v1268
    %v1271 = vcvt.s32.f32 %v1264
    %v1272 = vmul.f32 %v1271, %v1269
    %v1273 = vxor.u32 %v1272, 2147483648
    %v1274 = vsel %vm1191, %v1273, %v1272
    %v1275 = vsub.s32 4, %v1251
    %v1276 = vsel %vm1191, %v1275, %v1251
    %v1277 = vsel %vm1190, %v246, %v1274
    %v1278 = vsel %vm1190, 0, %v1276
    %v1279 = vcosq.f32.pop %v1277
    %v1280 = vsinq.f32.pop %v1277
    %vm1281 = vweird.f32 %v246
    %v1282 = vadd.s32 %v1278, 3
    %v1283 = vand.u32 %v1282, 3
    %vm1284 = vcmp.lt.s32.totalorder %v1283, 2
    %vm1285 = vcmp.eq.s32.totalorder %v1283, 0
    %v1286 = vxor.u32 %v1280, 2147483648
    %v1287 = vsel %vm1285, %v1279, %v1286
    %vm1288 = vcmp.eq.s32.totalorder %v1283, 2
    %v1289 = vxor.u32 %v1279, 2147483648
    %v1290 = vsel %vm1288, %v1289, %v1280
    %v1291 = vsel %vm1284, %v1287, %v1290
    %v1292 = vsel %vm1281, nan, %v1291
    %v1293 = vand.u32 2147483647, %v247
    %vm1294 = vcmp.le.f32.partialorder %v1293, 0.7853982
    %vm1295 = vcmp.lt.s32.totalorder %v247, 0
    %v1296 = vand.u32 %v247, 2139095040
    %v1297 = vshrl.u32 %v1296, 23
    %v1298 = vsub.s32 %v1297, 127
    %v1299 = vand.u32 2147483647, %v247
    %v1300 = vand.u32 %v1299, 8388607
    %v1301 = vor.u32 %v1300, 8388608
    %v1302 = vsub.s32 0, %v1301
    %v1303 = vadd.s32 %v1298, 1
    %vm1304 = vcmp.gt.s32.totalorder %v1303, 0
    %v1305 = vsel %vm1304, %v1303, 0
    %v1306 = vshrl.u32 %v1305, 5
    %v1307 = vand.u32 %v1305, 31
    %v1308 = vsub.s32 32, %v1307
    %v1309 = vshrl.u32 683565275, %v1308
    %v1310 = vshll.u32 683565275, %v1307
    %v1311 = vshrl.u32 2475754826, %v1308
    %v1312 = vor.u32 %v1310, %v1311
    %v1313 = vshll.u32 2475754826, %v1307
    %v1314 = vshrl.u32 2131351028, %v1308
    %v1315 = vor.u32 %v1313, %v1314
    %v1316 = vshll.u32 2131351028, %v1307
    %v1317 = vshrl.u32 2102212464, %v1308
    %v1318 = vor.u32 %v1316, %v1317
    %v1319 = vshll.u32 2102212464, %v1307
    %v1320 = vshrl.u32 920167782, %v1308
    %v1321 = vor.u32 %v1319, %v1320
    %v1322 = vshll.u32 920167782, %v1307
    %v1323 = vshrl.u32 1326507024, %v1308
    %v1324 = vor.u32 %v1322, %v1323
    %vm1325 = vcmp.lt.s32.totalorder %v1306, 1
    %vm1326 = vcmp.lt.s32.totalorder %v1306, 2
    %vm1327 = vcmp.lt.s32.totalorder %v1306, 3
    %vm1328 = vcmp.lt.s32.totalorder %v1306, 4
    %v1329 = vsel %vm1325, %v1309, %v1312
    %v1330 = vsel %vm1328, %v1318, 2102212464
    %v1331 = vsel %vm1327, %v1315, %v1330
    %v1332 = vsel %vm1326, %v1329, %v1331
    %v1333 = vsel %vm1325, %v1312, %v1315
    %v1334 = vsel %vm1328, %v1321, 920167782
    %v1335 = vsel %vm1327, %v1318, %v1334
    %v1336 = vsel %vm1326, %v1333, %v1335
    %v1337 = vsel %vm1325, %v1315, %v1318
    %v1338 = vsel %vm1328, %v1324, 1326507024
    %v1339 = vsel %vm1327, %v1321, %v1338
    %v1340 = vsel %vm1326, %v1337, %v1339
    %v1341 = vshll.u32 %v1301, 8
    %v1342 = vmul.u32.u64.compose %v1341, %v1340
    %v1343 = vextract.low.u32 %v1342
    %v1344 = vextract.high.u32 %v1342
    %v1345 = vmul.u32.u64.compose %v1341, %v1336
    %v1346 = vextract.low.u32 %v1345
    %v1347 = vextract.high.u32 %v1345
    %v1348 = vmul.u32 %v1341, %v1332
    %v1349 = vadd.s32 %v1344, %v1346
    %vm1350 = vc.u32 %v1344, %v1346
    %v1351 = vadd.s32 %v1347, 1
    %v1352 = vsel %vm1350, %v1351, %v1347
    %v1353 = vadd.s32 %v1348, %v1352
    %v1354 = vadd.s32 %v1353, 536870912
    %v1355 = vshrl.u32 %v1354, 30
    %v1356 = vshll.u32 %v1355, 30
    %v1357 = vsub.s32 %v1353, %v1356
    %vm1358 = vcmp.lt.s32.totalorder %v1357, 0
    %v1359 = vsub.s32 0, %v1357
    %v1360 = vsel %vm1358, %v1359, %v1357
    %v1361 = vclz %v1360
    %v1362 = vsub.s32 %v1361, 2
    %vm1363 = vcmp.gt.s32.totalorder 0, %v1362
    %v1364 = vsel %vm1363, 0, %v1362
    %v1365 = vsub.s32 32, %v1364
    %v1366 = vshll.u32 %v1357, %v1364
    %v1367 = vshrl.u32 %v1349, %v1365
    %v1368 = vor.u32 %v1366, %v1367
    %v1369 = vsub.s32 4294967266, %v1364
    %v1370 = vadd.s32 %v1369, 127
    %v1371 = vshll.u32 %v1370, 23
    %v1372 = vor.u32 4788187, %v1371
    %v1373 = vand.u32 2147483647, %v1372
    %v1375 = vcvt.s32.f32 %v1368
    %v1376 = vmul.f32 %v1375, %v1373
    %v1377 = vxor.u32 %v1376, 2147483648
    %v1378 = vsel %vm1295, %v1377, %v1376
    %v1379 = vsub.s32 4, %v1355
    %v1380 = vsel %vm1295, %v1379, %v1355
    %v1381 = vsel %vm1294, %v247, %v1378
    %v1382 = vsel %vm1294, 0, %v1380
    %v1383 = vcosq.f32.pop %v1381
    %v1384 = vsinq.f32.pop %v1381
    %vm1385 = vweird.f32 %v247
    %v1386 = vadd.s32 %v1382, 3
    %v1387 = vand.u32 %v1386, 3
    %vm1388 = vcmp.lt.s32.totalorder %v1387, 2
    %vm1389 = vcmp.eq.s32.totalorder %v1387, 0
    %v1390 = vxor.u32 %v1384, 2147483648
    %v1391 = vsel %vm1389, %v1383, %v1390
    %vm1392 = vcmp.eq.s32.totalorder %v1387, 2
    %v1393 = vxor.u32 %v1383, 2147483648
    %v1394 = vsel %vm1392, %v1393, %v1384
    %v1395 = vsel %vm1388, %v1391, %v1394
    %v1396 = vsel %vm1385, nan, %v1395
    %v1397 = vand.u32 2147483647, %v248
    %vm1398 = vcmp.le.f32.partialorder %v1397, 0.7853982
    %vm1399 = vcmp.lt.s32.totalorder %v248, 0
    %v1400 = vand.u32 %v248, 2139095040
    %v1401 = vshrl.u32 %v1400, 23
    %v1402 = vsub.s32 %v1401, 127
    %v1403 = vand.u32 2147483647, %v248
    %v1404 = vand.u32 %v1403, 8388607
    %v1405 = vor.u32 %v1404, 8388608
    %v1406 = vsub.s32 0, %v1405
    %v1407 = vadd.s32 %v1402, 1
    %vm1408 = vcmp.gt.s32.totalorder %v1407, 0
    %v1409 = vsel %vm1408, %v1407, 0
    %v1410 = vshrl.u32 %v1409, 5
    %v1411 = vand.u32 %v1409, 31
    %v1412 = vsub.s32 32, %v1411
    %v1413 = vshrl.u32 683565275, %v1412
    %v1414 = vshll.u32 683565275, %v1411
    %v1415 = vshrl.u32 2475754826, %v1412
    %v1416 = vor.u32 %v1414, %v1415
    %v1417 = vshll.u32 2475754826, %v1411
    %v1418 = vshrl.u32 2131351028, %v1412
    %v1419 = vor.u32 %v1417, %v1418
    %v1420 = vshll.u32 2131351028, %v1411
    %v1421 = vshrl.u32 2102212464, %v1412
    %v1422 = vor.u32 %v1420, %v1421
    %v1423 = vshll.u32 2102212464, %v1411
    %v1424 = vshrl.u32 920167782, %v1412
    %v1425 = vor.u32 %v1423, %v1424
    %v1426 = vshll.u32 920167782, %v1411
    %v1427 = vshrl.u32 1326507024, %v1412
    %v1428 = vor.u32 %v1426, %v1427
    %vm1429 = vcmp.lt.s32.totalorder %v1410, 1
    %vm1430 = vcmp.lt.s32.totalorder %v1410, 2
    %vm1431 = vcmp.lt.s32.totalorder %v1410, 3
    %vm1432 = vcmp.lt.s32.totalorder %v1410, 4
    %v1433 = vsel %vm1429, %v1413, %v1416
    %v1434 = vsel %vm1432, %v1422, 2102212464
    %v1435 = vsel %vm1431, %v1419, %v1434
    %v1436 = vsel %vm1430, %v1433, %v1435
    %v1437 = vsel %vm1429, %v1416, %v1419
    %v1438 = vsel %vm1432, %v1425, 920167782
    %v1439 = vsel %vm1431, %v1422, %v1438
    %v1440 = vsel %vm1430, %v1437, %v1439
    %v1441 = vsel %vm1429, %v1419, %v1422
    %v1442 = vsel %vm1432, %v1428, 1326507024
    %v1443 = vsel %vm1431, %v1425, %v1442
    %v1444 = vsel %vm1430, %v1441, %v1443
    %v1445 = vshll.u32 %v1405, 8
    %v1446 = vmul.u32.u64.compose %v1445, %v1444
    %v1447 = vextract.low.u32 %v1446
    %v1448 = vextract.high.u32 %v1446
    %v1449 = vmul.u32.u64.compose %v1445, %v1440
    %v1450 = vextract.low.u32 %v1449
    %v1451 = vextract.high.u32 %v1449
    %v1452 = vmul.u32 %v1445, %v1436
    %v1453 = vadd.s32 %v1448, %v1450
    %vm1454 = vc.u32 %v1448, %v1450
    %v1455 = vadd.s32 %v1451, 1
    %v1456 = vsel %vm1454, %v1455, %v1451
    %v1457 = vadd.s32 %v1452, %v1456
    %v1458 = vadd.s32 %v1457, 536870912
    %v1459 = vshrl.u32 %v1458, 30
    %v1460 = vshll.u32 %v1459, 30
    %v1461 = vsub.s32 %v1457, %v1460
    %vm1462 = vcmp.lt.s32.totalorder %v1461, 0
    %v1463 = vsub.s32 0, %v1461
    %v1464 = vsel %vm1462, %v1463, %v1461
    %v1465 = vclz %v1464
    %v1466 = vsub.s32 %v1465, 2
    %vm1467 = vcmp.gt.s32.totalorder 0, %v1466
    %v1468 = vsel %vm1467, 0, %v1466
    %v1469 = vsub.s32 32, %v1468
    %v1470 = vshll.u32 %v1461, %v1468
    %v1471 = vshrl.u32 %v1453, %v1469
    %v1472 = vor.u32 %v1470, %v1471
    %v1473 = vsub.s32 4294967266, %v1468
    %v1474 = vadd.s32 %v1473, 127
    %v1475 = vshll.u32 %v1474, 23
    %v1476 = vor.u32 4788187, %v1475
    %v1477 = vand.u32 2147483647, %v1476
    %v1479 = vcvt.s32.f32 %v1472
    %v1480 = vmul.f32 %v1479, %v1477
    %v1481 = vxor.u32 %v1480, 2147483648
    %v1482 = vsel %vm1399, %v1481, %v1480
    %v1483 = vsub.s32 4, %v1459
    %v1484 = vsel %vm1399, %v1483, %v1459
    %v1485 = vsel %vm1398, %v248, %v1482
    %v1486 = vsel %vm1398, 0, %v1484
    %v1487 = vcosq.f32.pop %v1485
    %v1488 = vsinq.f32.pop %v1485
    %vm1489 = vweird.f32 %v248
    %v1490 = vadd.s32 %v1486, 3
    %v1491 = vand.u32 %v1490, 3
    %vm1492 = vcmp.lt.s32.totalorder %v1491, 2
    %vm1493 = vcmp.eq.s32.totalorder %v1491, 0
    %v1494 = vxor.u32 %v1488, 2147483648
    %v1495 = vsel %vm1493, %v1487, %v1494
    %vm1496 = vcmp.eq.s32.totalorder %v1491, 2
    %v1497 = vxor.u32 %v1487, 2147483648
    %v1498 = vsel %vm1496, %v1497, %v1488
    %v1499 = vsel %vm1492, %v1495, %v1498
    %v1500 = vsel %vm1489, nan, %v1499
    %v1501 = vand.u32 2147483647, %v249
    %vm1502 = vcmp.le.f32.partialorder %v1501, 0.7853982
    %vm1503 = vcmp.lt.s32.totalorder %v249, 0
    %v1504 = vand.u32 %v249, 2139095040
    %v1505 = vshrl.u32 %v1504, 23
    %v1506 = vsub.s32 %v1505, 127
    %v1507 = vand.u32 2147483647, %v249
    %v1508 = vand.u32 %v1507, 8388607
    %v1509 = vor.u32 %v1508, 8388608
    %v1510 = vsub.s32 0, %v1509
    %v1511 = vadd.s32 %v1506, 1
    %vm1512 = vcmp.gt.s32.totalorder %v1511, 0
    %v1513 = vsel %vm1512, %v1511, 0
    %v1514 = vshrl.u32 %v1513, 5
    %v1515 = vand.u32 %v1513, 31
    %v1516 = vsub.s32 32, %v1515
    %v1517 = vshrl.u32 683565275, %v1516
    %v1518 = vshll.u32 683565275, %v1515
    %v1519 = vshrl.u32 2475754826, %v1516
    %v1520 = vor.u32 %v1518, %v1519
    %v1521 = vshll.u32 2475754826, %v1515
    %v1522 = vshrl.u32 2131351028, %v1516
    %v1523 = vor.u32 %v1521, %v1522
    %v1524 = vshll.u32 2131351028, %v1515
    %v1525 = vshrl.u32 2102212464, %v1516
    %v1526 = vor.u32 %v1524, %v1525
    %v1527 = vshll.u32 2102212464, %v1515
    %v1528 = vshrl.u32 920167782, %v1516
    %v1529 = vor.u32 %v1527, %v1528
    %v1530 = vshll.u32 920167782, %v1515
    %v1531 = vshrl.u32 1326507024, %v1516
    %v1532 = vor.u32 %v1530, %v1531
    %vm1533 = vcmp.lt.s32.totalorder %v1514, 1
    %vm1534 = vcmp.lt.s32.totalorder %v1514, 2
    %vm1535 = vcmp.lt.s32.totalorder %v1514, 3
    %vm1536 = vcmp.lt.s32.totalorder %v1514, 4
    %v1537 = vsel %vm1533, %v1517, %v1520
    %v1538 = vsel %vm1536, %v1526, 2102212464
    %v1539 = vsel %vm1535, %v1523, %v1538
    %v1540 = vsel %vm1534, %v1537, %v1539
    %v1541 = vsel %vm1533, %v1520, %v1523
    %v1542 = vsel %vm1536, %v1529, 920167782
    %v1543 = vsel %vm1535, %v1526, %v1542
    %v1544 = vsel %vm1534, %v1541, %v1543
    %v1545 = vsel %vm1533, %v1523, %v1526
    %v1546 = vsel %vm1536, %v1532, 1326507024
    %v1547 = vsel %vm1535, %v1529, %v1546
    %v1548 = vsel %vm1534, %v1545, %v1547
    %v1549 = vshll.u32 %v1509, 8
    %v1550 = vmul.u32.u64.compose %v1549, %v1548
    %v1551 = vextract.low.u32 %v1550
    %v1552 = vextract.high.u32 %v1550
    %v1553 = vmul.u32.u64.compose %v1549, %v1544
    %v1554 = vextract.low.u32 %v1553
    %v1555 = vextract.high.u32 %v1553
    %v1556 = vmul.u32 %v1549, %v1540
    %v1557 = vadd.s32 %v1552, %v1554
    %vm1558 = vc.u32 %v1552, %v1554
    %v1559 = vadd.s32 %v1555, 1
    %v1560 = vsel %vm1558, %v1559, %v1555
    %v1561 = vadd.s32 %v1556, %v1560
    %v1562 = vadd.s32 %v1561, 536870912
    %v1563 = vshrl.u32 %v1562, 30
    %v1564 = vshll.u32 %v1563, 30
    %v1565 = vsub.s32 %v1561, %v1564
    %vm1566 = vcmp.lt.s32.totalorder %v1565, 0
    %v1567 = vsub.s32 0, %v1565
    %v1568 = vsel %vm1566, %v1567, %v1565
    %v1569 = vclz %v1568
    %v1570 = vsub.s32 %v1569, 2
    %vm1571 = vcmp.gt.s32.totalorder 0, %v1570
    %v1572 = vsel %vm1571, 0, %v1570
    %v1573 = vsub.s32 32, %v1572
    %v1574 = vshll.u32 %v1565, %v1572
    %v1575 = vshrl.u32 %v1557, %v1573
    %v1576 = vor.u32 %v1574, %v1575
    %v1577 = vsub.s32 4294967266, %v1572
    %v1578 = vadd.s32 %v1577, 127
    %v1579 = vshll.u32 %v1578, 23
    %v1580 = vor.u32 4788187, %v1579
    %v1581 = vand.u32 2147483647, %v1580
    %v1583 = vcvt.s32.f32 %v1576
    %v1584 = vmul.f32 %v1583, %v1581
    %v1585 = vxor.u32 %v1584, 2147483648
    %v1586 = vsel %vm1503, %v1585, %v1584
    %v1587 = vsub.s32 4, %v1563
    %v1588 = vsel %vm1503, %v1587, %v1563
    %v1589 = vsel %vm1502, %v249, %v1586
    %v1590 = vsel %vm1502, 0, %v1588
    %v1591 = vcosq.f32.pop %v1589
    %v1592 = vsinq.f32.pop %v1589
    %vm1593 = vweird.f32 %v249
    %v1594 = vadd.s32 %v1590, 3
    %v1595 = vand.u32 %v1594, 3
    %vm1596 = vcmp.lt.s32.totalorder %v1595, 2
    %vm1597 = vcmp.eq.s32.totalorder %v1595, 0
    %v1598 = vxor.u32 %v1592, 2147483648
    %v1599 = vsel %vm1597, %v1591, %v1598
    %vm1600 = vcmp.eq.s32.totalorder %v1595, 2
    %v1601 = vxor.u32 %v1591, 2147483648
    %v1602 = vsel %vm1600, %v1601, %v1592
    %v1603 = vsel %vm1596, %v1599, %v1602
    %v1604 = vsel %vm1593, nan, %v1603
    %v1605 = vand.u32 2147483647, %v250
    %vm1606 = vcmp.le.f32.partialorder %v1605, 0.7853982
    %vm1607 = vcmp.lt.s32.totalorder %v250, 0
    %v1608 = vand.u32 %v250, 2139095040
    %v1609 = vshrl.u32 %v1608, 23
    %v1610 = vsub.s32 %v1609, 127
    %v1611 = vand.u32 2147483647, %v250
    %v1612 = vand.u32 %v1611, 8388607
    %v1613 = vor.u32 %v1612, 8388608
    %v1614 = vsub.s32 0, %v1613
    %v1615 = vadd.s32 %v1610, 1
    %vm1616 = vcmp.gt.s32.totalorder %v1615, 0
    %v1617 = vsel %vm1616, %v1615, 0
    %v1618 = vshrl.u32 %v1617, 5
    %v1619 = vand.u32 %v1617, 31
    %v1620 = vsub.s32 32, %v1619
    %v1621 = vshrl.u32 683565275, %v1620
    %v1622 = vshll.u32 683565275, %v1619
    %v1623 = vshrl.u32 2475754826, %v1620
    %v1624 = vor.u32 %v1622, %v1623
    %v1625 = vshll.u32 2475754826, %v1619
    %v1626 = vshrl.u32 2131351028, %v1620
    %v1627 = vor.u32 %v1625, %v1626
    %v1628 = vshll.u32 2131351028, %v1619
    %v1629 = vshrl.u32 2102212464, %v1620
    %v1630 = vor.u32 %v1628, %v1629
    %v1631 = vshll.u32 2102212464, %v1619
    %v1632 = vshrl.u32 920167782, %v1620
    %v1633 = vor.u32 %v1631, %v1632
    %v1634 = vshll.u32 920167782, %v1619
    %v1635 = vshrl.u32 1326507024, %v1620
    %v1636 = vor.u32 %v1634, %v1635
    %vm1637 = vcmp.lt.s32.totalorder %v1618, 1
    %vm1638 = vcmp.lt.s32.totalorder %v1618, 2
    %vm1639 = vcmp.lt.s32.totalorder %v1618, 3
    %vm1640 = vcmp.lt.s32.totalorder %v1618, 4
    %v1641 = vsel %vm1637, %v1621, %v1624
    %v1642 = vsel %vm1640, %v1630, 2102212464
    %v1643 = vsel %vm1639, %v1627, %v1642
    %v1644 = vsel %vm1638, %v1641, %v1643
    %v1645 = vsel %vm1637, %v1624, %v1627
    %v1646 = vsel %vm1640, %v1633, 920167782
    %v1647 = vsel %vm1639, %v1630, %v1646
    %v1648 = vsel %vm1638, %v1645, %v1647
    %v1649 = vsel %vm1637, %v1627, %v1630
    %v1650 = vsel %vm1640, %v1636, 1326507024
    %v1651 = vsel %vm1639, %v1633, %v1650
    %v1652 = vsel %vm1638, %v1649, %v1651
    %v1653 = vshll.u32 %v1613, 8
    %v1654 = vmul.u32.u64.compose %v1653, %v1652
    %v1655 = vextract.low.u32 %v1654
    %v1656 = vextract.high.u32 %v1654
    %v1657 = vmul.u32.u64.compose %v1653, %v1648
    %v1658 = vextract.low.u32 %v1657
    %v1659 = vextract.high.u32 %v1657
    %v1660 = vmul.u32 %v1653, %v1644
    %v1661 = vadd.s32 %v1656, %v1658
    %vm1662 = vc.u32 %v1656, %v1658
    %v1663 = vadd.s32 %v1659, 1
    %v1664 = vsel %vm1662, %v1663, %v1659
    %v1665 = vadd.s32 %v1660, %v1664
    %v1666 = vadd.s32 %v1665, 536870912
    %v1667 = vshrl.u32 %v1666, 30
    %v1668 = vshll.u32 %v1667, 30
    %v1669 = vsub.s32 %v1665, %v1668
    %vm1670 = vcmp.lt.s32.totalorder %v1669, 0
    %v1671 = vsub.s32 0, %v1669
    %v1672 = vsel %vm1670, %v1671, %v1669
    %v1673 = vclz %v1672
    %v1674 = vsub.s32 %v1673, 2
    %vm1675 = vcmp.gt.s32.totalorder 0, %v1674
    %v1676 = vsel %vm1675, 0, %v1674
    %v1677 = vsub.s32 32, %v1676
    %v1678 = vshll.u32 %v1669, %v1676
    %v1679 = vshrl.u32 %v1661, %v1677
    %v1680 = vor.u32 %v1678, %v1679
    %v1681 = vsub.s32 4294967266, %v1676
    %v1682 = vadd.s32 %v1681, 127
    %v1683 = vshll.u32 %v1682, 23
    %v1684 = vor.u32 4788187, %v1683
    %v1685 = vand.u32 2147483647, %v1684
    %v1687 = vcvt.s32.f32 %v1680
    %v1688 = vmul.f32 %v1687, %v1685
    %v1689 = vxor.u32 %v1688, 2147483648
    %v1690 = vsel %vm1607, %v1689, %v1688
    %v1691 = vsub.s32 4, %v1667
    %v1692 = vsel %vm1607, %v1691, %v1667
    %v1693 = vsel %vm1606, %v250, %v1690
    %v1694 = vsel %vm1606, 0, %v1692
    %v1695 = vcosq.f32.pop %v1693
    %v1696 = vsinq.f32.pop %v1693
    %vm1697 = vweird.f32 %v250
    %v1698 = vadd.s32 %v1694, 3
    %v1699 = vand.u32 %v1698, 3
    %vm1700 = vcmp.lt.s32.totalorder %v1699, 2
    %vm1701 = vcmp.eq.s32.totalorder %v1699, 0
    %v1702 = vxor.u32 %v1696, 2147483648
    %v1703 = vsel %vm1701, %v1695, %v1702
    %vm1704 = vcmp.eq.s32.totalorder %v1699, 2
    %v1705 = vxor.u32 %v1695, 2147483648
    %v1706 = vsel %vm1704, %v1705, %v1696
    %v1707 = vsel %vm1700, %v1703, %v1706
    %v1708 = vsel %vm1697, nan, %v1707
    %v1709 = vand.u32 2147483647, %v251
    %vm1710 = vcmp.le.f32.partialorder %v1709, 0.7853982
    %vm1711 = vcmp.lt.s32.totalorder %v251, 0
    %v1712 = vand.u32 %v251, 2139095040
    %v1713 = vshrl.u32 %v1712, 23
    %v1714 = vsub.s32 %v1713, 127
    %v1715 = vand.u32 2147483647, %v251
    %v1716 = vand.u32 %v1715, 8388607
    %v1717 = vor.u32 %v1716, 8388608
    %v1718 = vsub.s32 0, %v1717
    %v1719 = vadd.s32 %v1714, 1
    %vm1720 = vcmp.gt.s32.totalorder %v1719, 0
    %v1721 = vsel %vm1720, %v1719, 0
    %v1722 = vshrl.u32 %v1721, 5
    %v1723 = vand.u32 %v1721, 31
    %v1724 = vsub.s32 32, %v1723
    %v1725 = vshrl.u32 683565275, %v1724
    %v1726 = vshll.u32 683565275, %v1723
    %v1727 = vshrl.u32 2475754826, %v1724
    %v1728 = vor.u32 %v1726, %v1727
    %v1729 = vshll.u32 2475754826, %v1723
    %v1730 = vshrl.u32 2131351028, %v1724
    %v1731 = vor.u32 %v1729, %v1730
    %v1732 = vshll.u32 2131351028, %v1723
    %v1733 = vshrl.u32 2102212464, %v1724
    %v1734 = vor.u32 %v1732, %v1733
    %v1735 = vshll.u32 2102212464, %v1723
    %v1736 = vshrl.u32 920167782, %v1724
    %v1737 = vor.u32 %v1735, %v1736
    %v1738 = vshll.u32 920167782, %v1723
    %v1739 = vshrl.u32 1326507024, %v1724
    %v1740 = vor.u32 %v1738, %v1739
    %vm1741 = vcmp.lt.s32.totalorder %v1722, 1
    %vm1742 = vcmp.lt.s32.totalorder %v1722, 2
    %vm1743 = vcmp.lt.s32.totalorder %v1722, 3
    %vm1744 = vcmp.lt.s32.totalorder %v1722, 4
    %v1745 = vsel %vm1741, %v1725, %v1728
    %v1746 = vsel %vm1744, %v1734, 2102212464
    %v1747 = vsel %vm1743, %v1731, %v1746
    %v1748 = vsel %vm1742, %v1745, %v1747
    %v1749 = vsel %vm1741, %v1728, %v1731
    %v1750 = vsel %vm1744, %v1737, 920167782
    %v1751 = vsel %vm1743, %v1734, %v1750
    %v1752 = vsel %vm1742, %v1749, %v1751
    %v1753 = vsel %vm1741, %v1731, %v1734
    %v1754 = vsel %vm1744, %v1740, 1326507024
    %v1755 = vsel %vm1743, %v1737, %v1754
    %v1756 = vsel %vm1742, %v1753, %v1755
    %v1757 = vshll.u32 %v1717, 8
    %v1758 = vmul.u32.u64.compose %v1757, %v1756
    %v1759 = vextract.low.u32 %v1758
    %v1760 = vextract.high.u32 %v1758
    %v1761 = vmul.u32.u64.compose %v1757, %v1752
    %v1762 = vextract.low.u32 %v1761
    %v1763 = vextract.high.u32 %v1761
    %v1764 = vmul.u32 %v1757, %v1748
    %v1765 = vadd.s32 %v1760, %v1762
    %vm1766 = vc.u32 %v1760, %v1762
    %v1767 = vadd.s32 %v1763, 1
    %v1768 = vsel %vm1766, %v1767, %v1763
    %v1769 = vadd.s32 %v1764, %v1768
    %v1770 = vadd.s32 %v1769, 536870912
    %v1771 = vshrl.u32 %v1770, 30
    %v1772 = vshll.u32 %v1771, 30
    %v1773 = vsub.s32 %v1769, %v1772
    %vm1774 = vcmp.lt.s32.totalorder %v1773, 0
    %v1775 = vsub.s32 0, %v1773
    %v1776 = vsel %vm1774, %v1775, %v1773
    %v1777 = vclz %v1776
    %v1778 = vsub.s32 %v1777, 2
    %vm1779 = vcmp.gt.s32.totalorder 0, %v1778
    %v1780 = vsel %vm1779, 0, %v1778
    %v1781 = vsub.s32 32, %v1780
    %v1782 = vshll.u32 %v1773, %v1780
    %v1783 = vshrl.u32 %v1765, %v1781
    %v1784 = vor.u32 %v1782, %v1783
    %v1785 = vsub.s32 4294967266, %v1780
    %v1786 = vadd.s32 %v1785, 127
    %v1787 = vshll.u32 %v1786, 23
    %v1788 = vor.u32 4788187, %v1787
    %v1789 = vand.u32 2147483647, %v1788
    %v1791 = vcvt.s32.f32 %v1784
    %v1792 = vmul.f32 %v1791, %v1789
    %v1793 = vxor.u32 %v1792, 2147483648
    %v1794 = vsel %vm1711, %v1793, %v1792
    %v1795 = vsub.s32 4, %v1771
    %v1796 = vsel %vm1711, %v1795, %v1771
    %v1797 = vsel %vm1710, %v251, %v1794
    %v1798 = vsel %vm1710, 0, %v1796
    %v1799 = vcosq.f32.pop %v1797
    %v1800 = vsinq.f32.pop %v1797
    %vm1801 = vweird.f32 %v251
    %v1802 = vadd.s32 %v1798, 3
    %v1803 = vand.u32 %v1802, 3
    %vm1804 = vcmp.lt.s32.totalorder %v1803, 2
    %vm1805 = vcmp.eq.s32.totalorder %v1803, 0
    %v1806 = vxor.u32 %v1800, 2147483648
    %v1807 = vsel %vm1805, %v1799, %v1806
    %vm1808 = vcmp.eq.s32.totalorder %v1803, 2
    %v1809 = vxor.u32 %v1799, 2147483648
    %v1810 = vsel %vm1808, %v1809, %v1800
    %v1811 = vsel %vm1804, %v1807, %v1810
    %v1812 = vsel %vm1801, nan, %v1811
    %v1813 = vand.u32 2147483647, %v252
    %vm1814 = vcmp.le.f32.partialorder %v1813, 0.7853982
    %vm1815 = vcmp.lt.s32.totalorder %v252, 0
    %v1816 = vand.u32 %v252, 2139095040
    %v1817 = vshrl.u32 %v1816, 23
    %v1818 = vsub.s32 %v1817, 127
    %v1819 = vand.u32 2147483647, %v252
    %v1820 = vand.u32 %v1819, 8388607
    %v1821 = vor.u32 %v1820, 8388608
    %v1822 = vsub.s32 0, %v1821
    %v1823 = vadd.s32 %v1818, 1
    %vm1824 = vcmp.gt.s32.totalorder %v1823, 0
    %v1825 = vsel %vm1824, %v1823, 0
    %v1826 = vshrl.u32 %v1825, 5
    %v1827 = vand.u32 %v1825, 31
    %v1828 = vsub.s32 32, %v1827
    %v1829 = vshrl.u32 683565275, %v1828
    %v1830 = vshll.u32 683565275, %v1827
    %v1831 = vshrl.u32 2475754826, %v1828
    %v1832 = vor.u32 %v1830, %v1831
    %v1833 = vshll.u32 2475754826, %v1827
    %v1834 = vshrl.u32 2131351028, %v1828
    %v1835 = vor.u32 %v1833, %v1834
    %v1836 = vshll.u32 2131351028, %v1827
    %v1837 = vshrl.u32 2102212464, %v1828
    %v1838 = vor.u32 %v1836, %v1837
    %v1839 = vshll.u32 2102212464, %v1827
    %v1840 = vshrl.u32 920167782, %v1828
    %v1841 = vor.u32 %v1839, %v1840
    %v1842 = vshll.u32 920167782, %v1827
    %v1843 = vshrl.u32 1326507024, %v1828
    %v1844 = vor.u32 %v1842, %v1843
    %vm1845 = vcmp.lt.s32.totalorder %v1826, 1
    %vm1846 = vcmp.lt.s32.totalorder %v1826, 2
    %vm1847 = vcmp.lt.s32.totalorder %v1826, 3
    %vm1848 = vcmp.lt.s32.totalorder %v1826, 4
    %v1849 = vsel %vm1845, %v1829, %v1832
    %v1850 = vsel %vm1848, %v1838, 2102212464
    %v1851 = vsel %vm1847, %v1835, %v1850
    %v1852 = vsel %vm1846, %v1849, %v1851
    %v1853 = vsel %vm1845, %v1832, %v1835
    %v1854 = vsel %vm1848, %v1841, 920167782
    %v1855 = vsel %vm1847, %v1838, %v1854
    %v1856 = vsel %vm1846, %v1853, %v1855
    %v1857 = vsel %vm1845, %v1835, %v1838
    %v1858 = vsel %vm1848, %v1844, 1326507024
    %v1859 = vsel %vm1847, %v1841, %v1858
    %v1860 = vsel %vm1846, %v1857, %v1859
    %v1861 = vshll.u32 %v1821, 8
    %v1862 = vmul.u32.u64.compose %v1861, %v1860
    %v1863 = vextract.low.u32 %v1862
    %v1864 = vextract.high.u32 %v1862
    %v1865 = vmul.u32.u64.compose %v1861, %v1856
    %v1866 = vextract.low.u32 %v1865
    %v1867 = vextract.high.u32 %v1865
    %v1868 = vmul.u32 %v1861, %v1852
    %v1869 = vadd.s32 %v1864, %v1866
    %vm1870 = vc.u32 %v1864, %v1866
    %v1871 = vadd.s32 %v1867, 1
    %v1872 = vsel %vm1870, %v1871, %v1867
    %v1873 = vadd.s32 %v1868, %v1872
    %v1874 = vadd.s32 %v1873, 536870912
    %v1875 = vshrl.u32 %v1874, 30
    %v1876 = vshll.u32 %v1875, 30
    %v1877 = vsub.s32 %v1873, %v1876
    %vm1878 = vcmp.lt.s32.totalorder %v1877, 0
    %v1879 = vsub.s32 0, %v1877
    %v1880 = vsel %vm1878, %v1879, %v1877
    %v1881 = vclz %v1880
    %v1882 = vsub.s32 %v1881, 2
    %vm1883 = vcmp.gt.s32.totalorder 0, %v1882
    %v1884 = vsel %vm1883, 0, %v1882
    %v1885 = vsub.s32 32, %v1884
    %v1886 = vshll.u32 %v1877, %v1884
    %v1887 = vshrl.u32 %v1869, %v1885
    %v1888 = vor.u32 %v1886, %v1887
    %v1889 = vsub.s32 4294967266, %v1884
    %v1890 = vadd.s32 %v1889, 127
    %v1891 = vshll.u32 %v1890, 23
    %v1892 = vor.u32 4788187, %v1891
    %v1893 = vand.u32 2147483647, %v1892
    %v1895 = vcvt.s32.f32 %v1888
    %v1896 = vmul.f32 %v1895, %v1893
    %v1897 = vxor.u32 %v1896, 2147483648
    %v1898 = vsel %vm1815, %v1897, %v1896
    %v1899 = vsub.s32 4, %v1875
    %v1900 = vsel %vm1815, %v1899, %v1875
    %v1901 = vsel %vm1814, %v252, %v1898
    %v1902 = vsel %vm1814, 0, %v1900
    %v1903 = vcosq.f32.pop %v1901
    %v1904 = vsinq.f32.pop %v1901
    %vm1905 = vweird.f32 %v252
    %v1906 = vadd.s32 %v1902, 3
    %v1907 = vand.u32 %v1906, 3
    %vm1908 = vcmp.lt.s32.totalorder %v1907, 2
    %vm1909 = vcmp.eq.s32.totalorder %v1907, 0
    %v1910 = vxor.u32 %v1904, 2147483648
    %v1911 = vsel %vm1909, %v1903, %v1910
    %vm1912 = vcmp.eq.s32.totalorder %v1907, 2
    %v1913 = vxor.u32 %v1903, 2147483648
    %v1914 = vsel %vm1912, %v1913, %v1904
    %v1915 = vsel %vm1908, %v1911, %v1914
    %v1916 = vsel %vm1905, nan, %v1915
    %1917 = vst [vmem:[#allocation2] sm:$0xff] %v356
    %1918 = vst [vmem:[#allocation2 + $0x8] sm:$0xff] %v460
    %1919 = vst [vmem:[#allocation2 + $0x10] sm:$0xff] %v564
    %1920 = vst [vmem:[#allocation2 + $0x18] sm:$0xff] %v668
    %1921 = vst [vmem:[#allocation2 + $0x20] sm:$0xff] %v772
    %1922 = vst [vmem:[#allocation2 + $0x28] sm:$0xff] %v876
    %1923 = vst [vmem:[#allocation2 + $0x30] sm:$0xff] %v980
    %1924 = vst [vmem:[#allocation2 + $0x38] sm:$0xff] %v1084
    %1925 = vst [vmem:[#allocation2 + $0x40] sm:$0xff] %v1188
    %1926 = vst [vmem:[#allocation2 + $0x48] sm:$0xff] %v1292
    %1927 = vst [vmem:[#allocation2 + $0x50] sm:$0xff] %v1396
    %1928 = vst [vmem:[#allocation2 + $0x58] sm:$0xff] %v1500
    %1929 = vst [vmem:[#allocation2 + $0x60] sm:$0xff] %v1604
    %1930 = vst [vmem:[#allocation2 + $0x68] sm:$0xff] %v1708
    %1931 = vst [vmem:[#allocation2 + $0x70] sm:$0xff] %v1812
    %1932 = vst [vmem:[#allocation2 + $0x78] sm:$0xff] %v1916
    // Predicated region
    $region22: #{tpu_custom_call.1} parent=1 // pred_check
      _
    $region23: #{tpu_custom_call.1} parent=1 // pred_check_branch
      %1934 = sbr.rel (0) target = $region25
    $region24: #{tpu_custom_call.1} parent=1 // pred_region
      %s1936 = ssub.s32 2048, 2048
      %1937 = vsyncadd [#allocation3], %s1936
      %s1938 = sshll.u32 [#allocation2], 4
      %s1939 = int_to_ptr.vmem [resolvable:$true] %s1938
      %1944 = dma.vmem_to_hbm [thread:$0]  %s1939, 2048, %s5, [#allocation3], 256, 256, 16
    $region25: #{tpu_custom_call.1} parent=1 // pred_fallthru
      _
    // Predicated region
    $region26: #{tpu_custom_call.1} parent=1 // pred_check
      _
    $region27: #{tpu_custom_call.1} parent=1 // pred_check_branch
      %1946 = sbr.rel (0) target = $region29
    $region28: #{tpu_custom_call.1} parent=1 // pred_region
      %1947 = dma.done [#allocation3], 2048
    $region29: #{tpu_custom_call.1} parent=1 // pred_fallthru
      _
    %1948 = vsyncpa [#allocation3], 1

</llo_original>
